<compile_context>
chip_gen: v7x
topology: tpu7x:2x2x1
jax: 0.10.0
libtpu: 0.0.40
codegen_flags: <defaults>
</compile_context>

<pallas_src>
import functools
import math

import jax
import jax.numpy as jnp
from jax.experimental import pallas as pl
from jax.experimental.pallas import tpu as pltpu


# ----------------------------------------------------------------------------
# Fused kernel: whole TCNN forward for Bt batch samples per grid step.
# refs = (x_ref, <per-block weight refs...>, wf_ref, bf_ref, o_ref)
# ----------------------------------------------------------------------------
def _tcnn_fused_kernel(*refs, meta, Bt, T, K, compute_dtype):
    x_ref = refs[0]
    o_ref = refs[-1]
    M = Bt * T

    # Per-sample time index (M, 1): used to zero rows that rolled across the
    # causal boundary (and, for Bt > 1, across sample boundaries -- the same
    # rows, so one mask handles both).
    t_idx = jax.lax.broadcasted_iota(jnp.int32, (Bt, T, 1), 1).reshape(M, 1)

    def causal_conv(hf, w_ref, b_ref, dilation):
        # hf: (M, cin) f32, flattened over (sample, time). w_ref: (K, cin, cout).
        hc = hf.astype(compute_dtype)
        # Unshifted tap (j = K-1): fold the bias into the accumulator init.
        acc = (jnp.dot(hc, w_ref[K - 1].astype(compute_dtype),
                       preferred_element_type=jnp.float32)
               + b_ref[...].astype(jnp.float32))
        for j in range(K - 1):                      # K tiny & static -> unrolled
            s = (K - 1 - j) * dilation
            zj = jnp.dot(hc, w_ref[j].astype(compute_dtype),
                         preferred_element_type=jnp.float32)
            zj = pltpu.roll(zj, shift=s, axis=0)    # shift forward in time (XLU)
            acc = acc + jnp.where(t_idx >= s, zj, 0.0)
        return acc

    C0 = x_ref.shape[-1]
    h = x_ref[...].astype(jnp.float32).reshape(M, C0)

    idx = 1
    for (dilation, has_res) in meta:
        w1, b1, w2, b2 = refs[idx], refs[idx + 1], refs[idx + 2], refs[idx + 3]
        idx += 4
        if has_res:                                 # 1x1 residual projection
            wr, br = refs[idx], refs[idx + 1]
            idx += 2
            res = (jnp.dot(h.astype(compute_dtype), wr[...].astype(compute_dtype),
                           preferred_element_type=jnp.float32)
                   + br[...].astype(jnp.float32))
        else:                                       # identity residual
            res = h
        h1 = jnp.maximum(causal_conv(h, w1, b1, dilation), 0.0)
        h2 = jnp.maximum(causal_conv(h1, w2, b2, dilation), 0.0)
        h = jnp.maximum(h2 + res, 0.0)              # relu(network(x) + residual(x))

    # Final: gather last time step of every sample, apply fc in one dot.
    wf_ref, bf_ref = refs[idx], refs[idx + 1]
    Cl = h.shape[-1]
    last = h.reshape(Bt, T, Cl)[:, T - 1:T, :].reshape(Bt, Cl)
    out = (jnp.dot(last.astype(compute_dtype), wf_ref[...].astype(compute_dtype),
                   preferred_element_type=jnp.float32)
           + bf_ref[...].astype(jnp.float32))       # (Bt, O)
    o_ref[0] = out.astype(o_ref.dtype)


# ----------------------------------------------------------------------------
# Wrapper: builds the flat arg/spec lists and calls pallas_call once.
# ----------------------------------------------------------------------------
def tcnn_forward(x, blocks, fc, kernel_size=3, num_cores=None,
                 compute_dtype=jnp.bfloat16):
    """x: (B, T, input_dim)  (PyTorch's pre-permute layout) -> (B, output_dim)."""
    B, T, C0 = x.shape
    wf, bf = fc
    O = wf.shape[1]
    K = kernel_size

    # One grid step per TensorCore (1 on v5e/v6e, 2 on v7x); whole batch folded
    # into the matmul M dimension per step.  Falls back to a single step if the
    # core count doesn't divide B or can't be detected.
    if num_cores is None:
        try:
            num_cores = int(getattr(jax.devices()[0], "num_cores", 1) or 1)
        except Exception:  # pragma: no cover
            num_cores = 1
    G = num_cores if (num_cores > 1 and B % num_cores == 0) else 1
    Bt = B // G

    def full_spec(arr):
        nd = arr.ndim
        return pl.BlockSpec(arr.shape, lambda g, _nd=nd: (0,) * _nd)

    args = [x]
    in_specs = [pl.BlockSpec((Bt, T, C0), lambda g: (g, 0, 0))]
    meta = []
    for p in blocks:
        Kw, cin, cout = p["w1"].shape
        assert Kw == K
        d = int(p["dilation"])
        blk_args = [p["w1"], p["b1"], p["w2"], p["b2"]]
        has_res = p["wr"] is not None
        if has_res:
            blk_args += [p["wr"], p["br"]]
        args += blk_args
        in_specs += [full_spec(a) for a in blk_args]
        meta.append((d, has_res))
    args += [wf, bf]
    in_specs += [full_spec(wf), full_spec(bf)]

    kern = functools.partial(_tcnn_fused_kernel, meta=tuple(meta), Bt=Bt, T=T,
                             K=K, compute_dtype=compute_dtype)
    out = pl.pallas_call(
        kern,
        # (G, Bt, O) so the last two block dims always equal the full array
        # dims (no sublane-alignment issue when Bt < 8); reshaped below.
        out_shape=jax.ShapeDtypeStruct((G, Bt, O), x.dtype),
        grid=(G,),
        in_specs=in_specs,
        out_specs=pl.BlockSpec((1, Bt, O), lambda g: (g, 0, 0)),
        compiler_params=pltpu.CompilerParams(
            dimension_semantics=("parallel",)),
    )(*args)
    return out.reshape(B, O)


# ----------------------------------------------------------------------------
# Parameter init (PyTorch-style uniform bounds) + pure-JAX reference.
# ----------------------------------------------------------------------------
def init_tcnn_params(key, input_dim, output_dim, num_channels, kernel_size=3):
    blocks = []
    in_c = input_dim
    for i, out_c in enumerate(num_channels):
        dilation = 2 ** i
        key, k1, k2, k3, k4, k5, k6 = jax.random.split(key, 7)
        lim1 = 1.0 / math.sqrt(in_c * kernel_size)
        w1 = jax.random.uniform(k1, (kernel_size, in_c, out_c), jnp.float32, -lim1, lim1)
        b1 = jax.random.uniform(k2, (1, out_c), jnp.float32, -lim1, lim1)
        lim2 = 1.0 / math.sqrt(out_c * kernel_size)
        w2 = jax.random.uniform(k3, (kernel_size, out_c, out_c), jnp.float32, -lim2, lim2)
        b2 = jax.random.uniform(k4, (1, out_c), jnp.float32, -lim2, lim2)
        if in_c != out_c:
            limr = 1.0 / math.sqrt(in_c)
            wr = jax.random.uniform(k5, (in_c, out_c), jnp.float32, -limr, limr)
            br = jax.random.uniform(k6, (1, out_c), jnp.float32, -limr, limr)
        else:
            wr, br = None, None
        blocks.append(dict(w1=w1, b1=b1, w2=w2, b2=b2, wr=wr, br=br,
                           dilation=dilation))
        in_c = out_c
    key, kf1, kf2 = jax.random.split(key, 3)
    limf = 1.0 / math.sqrt(in_c)
    wf = jax.random.uniform(kf1, (in_c, output_dim), jnp.float32, -limf, limf)
    bf = jax.random.uniform(kf2, (1, output_dim), jnp.float32, -limf, limf)
    return blocks, (wf, bf)


def tcnn_reference(x, blocks, fc, kernel_size=3):
    """Pure-JAX (XLA) reference of the PyTorch forward, f32 everywhere."""
    P = jax.lax.Precision.HIGHEST
    B, T, _ = x.shape
    h = x.astype(jnp.float32)
    for p in blocks:
        K = kernel_size
        d = p["dilation"]
        pad = (K - 1) * d

        def conv(hh, w, b):
            hp = jnp.pad(hh, ((0, 0), (pad, 0), (0, 0)))
            acc = jnp.zeros((B, T, w.shape[2]), jnp.float32)
            for j in range(K):
                acc = acc + jnp.einsum("btc,co->bto",
                                       hp[:, j * d:j * d + T, :], w[j],
                                       precision=P)
            return acc + b

        if p["wr"] is None:
            res = h
        else:
            res = jnp.einsum("btc,co->bto", h, p["wr"], precision=P) + p["br"]
        h1 = jax.nn.relu(conv(h, p["w1"], p["b1"]))
        h2 = jax.nn.relu(conv(h1, p["w2"], p["b2"]))
        h = jax.nn.relu(h2 + res)
    wf, bf = fc
    return jnp.einsum("bc,co->bo", h[:, -1, :], wf, precision=P) + bf


# ----------------------------------------------------------------------------
if __name__ == "__main__":
    B, T = 2, 16
    input_dim, output_dim = 4, 3
    num_channels = (8, 8)    # block 0: 4->8 (1x1 residual conv), block 1: 8->8 (identity)
    kernel_size = 3

    key = jax.random.PRNGKey(0)
    key_x, key_p = jax.random.split(key)
    x = jax.random.normal(key_x, (B, T, input_dim), jnp.float32)
    blocks, fc = init_tcnn_params(key_p, input_dim, output_dim, num_channels,
                                  kernel_size=kernel_size)

    ref = tcnn_reference(x, blocks, fc, kernel_size=kernel_size)

    # 1) f32 MXU-operand path: tight check of the roll/mask conv algorithm.
    out_f32 = tcnn_forward(x, blocks, fc, kernel_size=kernel_size,
                           compute_dtype=jnp.float32)
    jax.block_until_ready(out_f32)
    assert out_f32.shape == (B, output_dim)
    err_f32 = float(jnp.max(jnp.abs(out_f32 - ref)))
    assert err_f32 < 1e-2, f"f32 mismatch vs reference: max_err={err_f32}"

    # 2) default bf16 MXU-operand path (f32 accumulation + elementwise).
    out_bf16 = tcnn_forward(x, blocks, fc, kernel_size=kernel_size)
    jax.block_until_ready(out_bf16)
    assert out_bf16.shape == (B, output_dim)
    err_bf16 = float(jnp.max(jnp.abs(out_bf16 - ref)))
    assert err_bf16 < 5e-2, f"bf16 mismatch vs reference: max_err={err_bf16}"

    print("KERNEL_OK")
</pallas_src>

<mosaic_0001>
module attributes {stable_mosaic.version = 11 : i64} {
  func.func @_tcnn_fused_kernel(%arg0: i32, %arg1: memref<2x16x4xf32, #tpu.memory_space<vmem>>, %arg2: memref<3x4x8xf32, #tpu.memory_space<vmem>>, %arg3: memref<1x8xf32, #tpu.memory_space<vmem>>, %arg4: memref<3x8x8xf32, #tpu.memory_space<vmem>>, %arg5: memref<1x8xf32, #tpu.memory_space<vmem>>, %arg6: memref<4x8xf32, #tpu.memory_space<vmem>>, %arg7: memref<1x8xf32, #tpu.memory_space<vmem>>, %arg8: memref<3x8x8xf32, #tpu.memory_space<vmem>>, %arg9: memref<1x8xf32, #tpu.memory_space<vmem>>, %arg10: memref<3x8x8xf32, #tpu.memory_space<vmem>>, %arg11: memref<1x8xf32, #tpu.memory_space<vmem>>, %arg12: memref<8x3xf32, #tpu.memory_space<vmem>>, %arg13: memref<1x3xf32, #tpu.memory_space<vmem>>, %arg14: memref<1x2x3xf32, #tpu.memory_space<vmem>>) attributes {dimension_semantics = [#tpu.dimension_semantics<parallel>], iteration_bounds = array<i64: 1>, scalar_prefetch = 0 : i64, scratch_operands = 0 : i64, tpu.core_type = #tpu.core_type<tc>, window_params = [{transform_indices = @transform_0, window_bounds = array<i64: 2, 16, 4>}, {pipeline_mode = #tpu.pipeline_mode<synchronous>, transform_indices = @transform_1, window_bounds = array<i64: 3, 4, 8>}, {pipeline_mode = #tpu.pipeline_mode<synchronous>, transform_indices = @transform_2, window_bounds = array<i64: 1, 8>}, {pipeline_mode = #tpu.pipeline_mode<synchronous>, transform_indices = @transform_3, window_bounds = array<i64: 3, 8, 8>}, {pipeline_mode = #tpu.pipeline_mode<synchronous>, transform_indices = @transform_4, window_bounds = array<i64: 1, 8>}, {pipeline_mode = #tpu.pipeline_mode<synchronous>, transform_indices = @transform_5, window_bounds = array<i64: 4, 8>}, {pipeline_mode = #tpu.pipeline_mode<synchronous>, transform_indices = @transform_6, window_bounds = array<i64: 1, 8>}, {pipeline_mode = #tpu.pipeline_mode<synchronous>, transform_indices = @transform_7, window_bounds = array<i64: 3, 8, 8>}, {pipeline_mode = #tpu.pipeline_mode<synchronous>, transform_indices = @transform_8, window_bounds = array<i64: 1, 8>}, {pipeline_mode = #tpu.pipeline_mode<synchronous>, transform_indices = @transform_9, window_bounds = array<i64: 3, 8, 8>}, {pipeline_mode = #tpu.pipeline_mode<synchronous>, transform_indices = @transform_10, window_bounds = array<i64: 1, 8>}, {pipeline_mode = #tpu.pipeline_mode<synchronous>, transform_indices = @transform_11, window_bounds = array<i64: 8, 3>}, {pipeline_mode = #tpu.pipeline_mode<synchronous>, transform_indices = @transform_12, window_bounds = array<i64: 1, 3>}, {transform_indices = @transform_13, window_bounds = array<i64: 1, 2, 3>}]} {
    %0 = tpu.iota {dimensions = array<i32: 1>} : vector<2x16x1xi32>
    %1 = vector.shape_cast %0 : vector<2x16x1xi32> to vector<32x1xi32>
    %c0 = arith.constant 0 : index
    %c0_0 = arith.constant 0 : index
    %c0_1 = arith.constant 0 : index
    %2 = vector.load %arg1[%c0, %c0_0, %c0_1] : memref<2x16x4xf32, #tpu.memory_space<vmem>>, vector<2x16x4xf32>
    %3 = vector.shape_cast %2 : vector<2x16x4xf32> to vector<32x4xf32>
    %c0_2 = arith.constant 0 : index
    %c0_3 = arith.constant 0 : index
    %4 = vector.load %arg6[%c0_2, %c0_3] : memref<4x8xf32, #tpu.memory_space<vmem>>, vector<4x8xf32>
    %cst = arith.constant dense<0.000000e+00> : vector<32x8xf32>
    %5 = tpu.matmul %3, %4, %cst {dimension_numbers = #tpu.dot_dimension_numbers<[1], [0], [0], [1], [0, 0, 1, 1], [], []>} : vector<32x4xf32>, vector<4x8xf32>, vector<32x8xf32> -> vector<32x8xf32>
    %c0_4 = arith.constant 0 : index
    %c0_5 = arith.constant 0 : index
    %6 = vector.load %arg7[%c0_4, %c0_5] : memref<1x8xf32, #tpu.memory_space<vmem>>, vector<1x8xf32>
    %7 = vector.broadcast %6 : vector<1x8xf32> to vector<32x8xf32>
    %8 = arith.addf %5, %7 : vector<32x8xf32>
    %c2 = arith.constant 2 : index
    %c0_6 = arith.constant 0 : index
    %c0_7 = arith.constant 0 : index
    %9 = vector.load %arg2[%c2, %c0_6, %c0_7] : memref<3x4x8xf32, #tpu.memory_space<vmem>>, vector<1x4x8xf32>
    %10 = vector.shape_cast %9 : vector<1x4x8xf32> to vector<4x8xf32>
    %cst_8 = arith.constant dense<0.000000e+00> : vector<32x8xf32>
    %11 = tpu.matmul %3, %10, %cst_8 {dimension_numbers = #tpu.dot_dimension_numbers<[1], [0], [0], [1], [0, 0, 1, 1], [], []>} : vector<32x4xf32>, vector<4x8xf32>, vector<32x8xf32> -> vector<32x8xf32>
    %c0_9 = arith.constant 0 : index
    %c0_10 = arith.constant 0 : index
    %12 = vector.load %arg3[%c0_9, %c0_10] : memref<1x8xf32, #tpu.memory_space<vmem>>, vector<1x8xf32>
    %13 = vector.broadcast %12 : vector<1x8xf32> to vector<32x8xf32>
    %14 = arith.addf %11, %13 : vector<32x8xf32>
    %c0_11 = arith.constant 0 : index
    %c0_12 = arith.constant 0 : index
    %c0_13 = arith.constant 0 : index
    %15 = vector.load %arg2[%c0_11, %c0_12, %c0_13] : memref<3x4x8xf32, #tpu.memory_space<vmem>>, vector<1x4x8xf32>
    %16 = vector.shape_cast %15 : vector<1x4x8xf32> to vector<4x8xf32>
    %cst_14 = arith.constant dense<0.000000e+00> : vector<32x8xf32>
    %17 = tpu.matmul %3, %16, %cst_14 {dimension_numbers = #tpu.dot_dimension_numbers<[1], [0], [0], [1], [0, 0, 1, 1], [], []>} : vector<32x4xf32>, vector<4x8xf32>, vector<32x8xf32> -> vector<32x8xf32>
    %c2_i32 = arith.constant 2 : i32
    %18 = tpu.dynamic_rotate %17 by %c2_i32 dim 0 : vector<32x8xf32>, i32 -> vector<32x8xf32>
    %c2_i32_15 = arith.constant 2 : i32
    %19 = vector.broadcast %c2_i32_15 : i32 to vector<32x1xi32>
    %20 = arith.cmpi sge, %1, %19 : vector<32x1xi32>
    %cst_16 = arith.constant 0.000000e+00 : f32
    %21 = vector.shape_cast %20 : vector<32x1xi1> to vector<32x1xi1>
    %22 = vector.broadcast %21 : vector<32x1xi1> to vector<32x8xi1>
    %23 = vector.broadcast %cst_16 : f32 to vector<32x8xf32>
    %24 = arith.select %22, %18, %23 : vector<32x8xi1>, vector<32x8xf32>
    %25 = arith.addf %14, %24 : vector<32x8xf32>
    %c1 = arith.constant 1 : index
    %c0_17 = arith.constant 0 : index
    %c0_18 = arith.constant 0 : index
    %26 = vector.load %arg2[%c1, %c0_17, %c0_18] : memref<3x4x8xf32, #tpu.memory_space<vmem>>, vector<1x4x8xf32>
    %27 = vector.shape_cast %26 : vector<1x4x8xf32> to vector<4x8xf32>
    %cst_19 = arith.constant dense<0.000000e+00> : vector<32x8xf32>
    %28 = tpu.matmul %3, %27, %cst_19 {dimension_numbers = #tpu.dot_dimension_numbers<[1], [0], [0], [1], [0, 0, 1, 1], [], []>} : vector<32x4xf32>, vector<4x8xf32>, vector<32x8xf32> -> vector<32x8xf32>
    %c1_i32 = arith.constant 1 : i32
    %29 = tpu.dynamic_rotate %28 by %c1_i32 dim 0 : vector<32x8xf32>, i32 -> vector<32x8xf32>
    %c1_i32_20 = arith.constant 1 : i32
    %30 = vector.broadcast %c1_i32_20 : i32 to vector<32x1xi32>
    %31 = arith.cmpi sge, %1, %30 : vector<32x1xi32>
    %cst_21 = arith.constant 0.000000e+00 : f32
    %32 = vector.shape_cast %31 : vector<32x1xi1> to vector<32x1xi1>
    %33 = vector.broadcast %32 : vector<32x1xi1> to vector<32x8xi1>
    %34 = vector.broadcast %cst_21 : f32 to vector<32x8xf32>
    %35 = arith.select %33, %29, %34 : vector<32x8xi1>, vector<32x8xf32>
    %36 = arith.addf %25, %35 : vector<32x8xf32>
    %cst_22 = arith.constant 0.000000e+00 : f32
    %37 = vector.broadcast %cst_22 : f32 to vector<32x8xf32>
    %38 = arith.maximumf %36, %37 : vector<32x8xf32>
    %c2_23 = arith.constant 2 : index
    %c0_24 = arith.constant 0 : index
    %c0_25 = arith.constant 0 : index
    %39 = vector.load %arg4[%c2_23, %c0_24, %c0_25] : memref<3x8x8xf32, #tpu.memory_space<vmem>>, vector<1x8x8xf32>
    %40 = vector.shape_cast %39 : vector<1x8x8xf32> to vector<8x8xf32>
    %cst_26 = arith.constant dense<0.000000e+00> : vector<32x8xf32>
    %41 = tpu.matmul %38, %40, %cst_26 {dimension_numbers = #tpu.dot_dimension_numbers<[1], [0], [0], [1], [0, 0, 1, 1], [], []>} : vector<32x8xf32>, vector<8x8xf32>, vector<32x8xf32> -> vector<32x8xf32>
    %c0_27 = arith.constant 0 : index
    %c0_28 = arith.constant 0 : index
    %42 = vector.load %arg5[%c0_27, %c0_28] : memref<1x8xf32, #tpu.memory_space<vmem>>, vector<1x8xf32>
    %43 = vector.broadcast %42 : vector<1x8xf32> to vector<32x8xf32>
    %44 = arith.addf %41, %43 : vector<32x8xf32>
    %c0_29 = arith.constant 0 : index
    %c0_30 = arith.constant 0 : index
    %c0_31 = arith.constant 0 : index
    %45 = vector.load %arg4[%c0_29, %c0_30, %c0_31] : memref<3x8x8xf32, #tpu.memory_space<vmem>>, vector<1x8x8xf32>
    %46 = vector.shape_cast %45 : vector<1x8x8xf32> to vector<8x8xf32>
    %cst_32 = arith.constant dense<0.000000e+00> : vector<32x8xf32>
    %47 = tpu.matmul %38, %46, %cst_32 {dimension_numbers = #tpu.dot_dimension_numbers<[1], [0], [0], [1], [0, 0, 1, 1], [], []>} : vector<32x8xf32>, vector<8x8xf32>, vector<32x8xf32> -> vector<32x8xf32>
    %c2_i32_33 = arith.constant 2 : i32
    %48 = tpu.dynamic_rotate %47 by %c2_i32_33 dim 0 : vector<32x8xf32>, i32 -> vector<32x8xf32>
    %c2_i32_34 = arith.constant 2 : i32
    %49 = vector.broadcast %c2_i32_34 : i32 to vector<32x1xi32>
    %50 = arith.cmpi sge, %1, %49 : vector<32x1xi32>
    %cst_35 = arith.constant 0.000000e+00 : f32
    %51 = vector.shape_cast %50 : vector<32x1xi1> to vector<32x1xi1>
    %52 = vector.broadcast %51 : vector<32x1xi1> to vector<32x8xi1>
    %53 = vector.broadcast %cst_35 : f32 to vector<32x8xf32>
    %54 = arith.select %52, %48, %53 : vector<32x8xi1>, vector<32x8xf32>
    %55 = arith.addf %44, %54 : vector<32x8xf32>
    %c1_36 = arith.constant 1 : index
    %c0_37 = arith.constant 0 : index
    %c0_38 = arith.constant 0 : index
    %56 = vector.load %arg4[%c1_36, %c0_37, %c0_38] : memref<3x8x8xf32, #tpu.memory_space<vmem>>, vector<1x8x8xf32>
    %57 = vector.shape_cast %56 : vector<1x8x8xf32> to vector<8x8xf32>
    %cst_39 = arith.constant dense<0.000000e+00> : vector<32x8xf32>
    %58 = tpu.matmul %38, %57, %cst_39 {dimension_numbers = #tpu.dot_dimension_numbers<[1], [0], [0], [1], [0, 0, 1, 1], [], []>} : vector<32x8xf32>, vector<8x8xf32>, vector<32x8xf32> -> vector<32x8xf32>
    %c1_i32_40 = arith.constant 1 : i32
    %59 = tpu.dynamic_rotate %58 by %c1_i32_40 dim 0 : vector<32x8xf32>, i32 -> vector<32x8xf32>
    %c1_i32_41 = arith.constant 1 : i32
    %60 = vector.broadcast %c1_i32_41 : i32 to vector<32x1xi32>
    %61 = arith.cmpi sge, %1, %60 : vector<32x1xi32>
    %cst_42 = arith.constant 0.000000e+00 : f32
    %62 = vector.shape_cast %61 : vector<32x1xi1> to vector<32x1xi1>
    %63 = vector.broadcast %62 : vector<32x1xi1> to vector<32x8xi1>
    %64 = vector.broadcast %cst_42 : f32 to vector<32x8xf32>
    %65 = arith.select %63, %59, %64 : vector<32x8xi1>, vector<32x8xf32>
    %66 = arith.addf %55, %65 : vector<32x8xf32>
    %cst_43 = arith.constant 0.000000e+00 : f32
    %67 = vector.broadcast %cst_43 : f32 to vector<32x8xf32>
    %68 = arith.maximumf %66, %67 : vector<32x8xf32>
    %69 = arith.addf %68, %8 : vector<32x8xf32>
    %cst_44 = arith.constant 0.000000e+00 : f32
    %70 = vector.broadcast %cst_44 : f32 to vector<32x8xf32>
    %71 = arith.maximumf %69, %70 : vector<32x8xf32>
    %c2_45 = arith.constant 2 : index
    %c0_46 = arith.constant 0 : index
    %c0_47 = arith.constant 0 : index
    %72 = vector.load %arg8[%c2_45, %c0_46, %c0_47] : memref<3x8x8xf32, #tpu.memory_space<vmem>>, vector<1x8x8xf32>
    %73 = vector.shape_cast %72 : vector<1x8x8xf32> to vector<8x8xf32>
    %cst_48 = arith.constant dense<0.000000e+00> : vector<32x8xf32>
    %74 = tpu.matmul %71, %73, %cst_48 {dimension_numbers = #tpu.dot_dimension_numbers<[1], [0], [0], [1], [0, 0, 1, 1], [], []>} : vector<32x8xf32>, vector<8x8xf32>, vector<32x8xf32> -> vector<32x8xf32>
    %c0_49 = arith.constant 0 : index
    %c0_50 = arith.constant 0 : index
    %75 = vector.load %arg9[%c0_49, %c0_50] : memref<1x8xf32, #tpu.memory_space<vmem>>, vector<1x8xf32>
    %76 = vector.broadcast %75 : vector<1x8xf32> to vector<32x8xf32>
    %77 = arith.addf %74, %76 : vector<32x8xf32>
    %c0_51 = arith.constant 0 : index
    %c0_52 = arith.constant 0 : index
    %c0_53 = arith.constant 0 : index
    %78 = vector.load %arg8[%c0_51, %c0_52, %c0_53] : memref<3x8x8xf32, #tpu.memory_space<vmem>>, vector<1x8x8xf32>
    %79 = vector.shape_cast %78 : vector<1x8x8xf32> to vector<8x8xf32>
    %cst_54 = arith.constant dense<0.000000e+00> : vector<32x8xf32>
    %80 = tpu.matmul %71, %79, %cst_54 {dimension_numbers = #tpu.dot_dimension_numbers<[1], [0], [0], [1], [0, 0, 1, 1], [], []>} : vector<32x8xf32>, vector<8x8xf32>, vector<32x8xf32> -> vector<32x8xf32>
    %c4_i32 = arith.constant 4 : i32
    %81 = tpu.dynamic_rotate %80 by %c4_i32 dim 0 : vector<32x8xf32>, i32 -> vector<32x8xf32>
    %c4_i32_55 = arith.constant 4 : i32
    %82 = vector.broadcast %c4_i32_55 : i32 to vector<32x1xi32>
    %83 = arith.cmpi sge, %1, %82 : vector<32x1xi32>
    %cst_56 = arith.constant 0.000000e+00 : f32
    %84 = vector.shape_cast %83 : vector<32x1xi1> to vector<32x1xi1>
    %85 = vector.broadcast %84 : vector<32x1xi1> to vector<32x8xi1>
    %86 = vector.broadcast %cst_56 : f32 to vector<32x8xf32>
    %87 = arith.select %85, %81, %86 : vector<32x8xi1>, vector<32x8xf32>
    %88 = arith.addf %77, %87 : vector<32x8xf32>
    %c1_57 = arith.constant 1 : index
    %c0_58 = arith.constant 0 : index
    %c0_59 = arith.constant 0 : index
    %89 = vector.load %arg8[%c1_57, %c0_58, %c0_59] : memref<3x8x8xf32, #tpu.memory_space<vmem>>, vector<1x8x8xf32>
    %90 = vector.shape_cast %89 : vector<1x8x8xf32> to vector<8x8xf32>
    %cst_60 = arith.constant dense<0.000000e+00> : vector<32x8xf32>
    %91 = tpu.matmul %71, %90, %cst_60 {dimension_numbers = #tpu.dot_dimension_numbers<[1], [0], [0], [1], [0, 0, 1, 1], [], []>} : vector<32x8xf32>, vector<8x8xf32>, vector<32x8xf32> -> vector<32x8xf32>
    %c2_i32_61 = arith.constant 2 : i32
    %92 = tpu.dynamic_rotate %91 by %c2_i32_61 dim 0 : vector<32x8xf32>, i32 -> vector<32x8xf32>
    %c2_i32_62 = arith.constant 2 : i32
    %93 = vector.broadcast %c2_i32_62 : i32 to vector<32x1xi32>
    %94 = arith.cmpi sge, %1, %93 : vector<32x1xi32>
    %cst_63 = arith.constant 0.000000e+00 : f32
    %95 = vector.shape_cast %94 : vector<32x1xi1> to vector<32x1xi1>
    %96 = vector.broadcast %95 : vector<32x1xi1> to vector<32x8xi1>
    %97 = vector.broadcast %cst_63 : f32 to vector<32x8xf32>
    %98 = arith.select %96, %92, %97 : vector<32x8xi1>, vector<32x8xf32>
    %99 = arith.addf %88, %98 : vector<32x8xf32>
    %cst_64 = arith.constant 0.000000e+00 : f32
    %100 = vector.broadcast %cst_64 : f32 to vector<32x8xf32>
    %101 = arith.maximumf %99, %100 : vector<32x8xf32>
    %c2_65 = arith.constant 2 : index
    %c0_66 = arith.constant 0 : index
    %c0_67 = arith.constant 0 : index
    %102 = vector.load %arg10[%c2_65, %c0_66, %c0_67] : memref<3x8x8xf32, #tpu.memory_space<vmem>>, vector<1x8x8xf32>
    %103 = vector.shape_cast %102 : vector<1x8x8xf32> to vector<8x8xf32>
    %cst_68 = arith.constant dense<0.000000e+00> : vector<32x8xf32>
    %104 = tpu.matmul %101, %103, %cst_68 {dimension_numbers = #tpu.dot_dimension_numbers<[1], [0], [0], [1], [0, 0, 1, 1], [], []>} : vector<32x8xf32>, vector<8x8xf32>, vector<32x8xf32> -> vector<32x8xf32>
    %c0_69 = arith.constant 0 : index
    %c0_70 = arith.constant 0 : index
    %105 = vector.load %arg11[%c0_69, %c0_70] : memref<1x8xf32, #tpu.memory_space<vmem>>, vector<1x8xf32>
    %106 = vector.broadcast %105 : vector<1x8xf32> to vector<32x8xf32>
    %107 = arith.addf %104, %106 : vector<32x8xf32>
    %c0_71 = arith.constant 0 : index
    %c0_72 = arith.constant 0 : index
    %c0_73 = arith.constant 0 : index
    %108 = vector.load %arg10[%c0_71, %c0_72, %c0_73] : memref<3x8x8xf32, #tpu.memory_space<vmem>>, vector<1x8x8xf32>
    %109 = vector.shape_cast %108 : vector<1x8x8xf32> to vector<8x8xf32>
    %cst_74 = arith.constant dense<0.000000e+00> : vector<32x8xf32>
    %110 = tpu.matmul %101, %109, %cst_74 {dimension_numbers = #tpu.dot_dimension_numbers<[1], [0], [0], [1], [0, 0, 1, 1], [], []>} : vector<32x8xf32>, vector<8x8xf32>, vector<32x8xf32> -> vector<32x8xf32>
    %c4_i32_75 = arith.constant 4 : i32
    %111 = tpu.dynamic_rotate %110 by %c4_i32_75 dim 0 : vector<32x8xf32>, i32 -> vector<32x8xf32>
    %c4_i32_76 = arith.constant 4 : i32
    %112 = vector.broadcast %c4_i32_76 : i32 to vector<32x1xi32>
    %113 = arith.cmpi sge, %1, %112 : vector<32x1xi32>
    %cst_77 = arith.constant 0.000000e+00 : f32
    %114 = vector.shape_cast %113 : vector<32x1xi1> to vector<32x1xi1>
    %115 = vector.broadcast %114 : vector<32x1xi1> to vector<32x8xi1>
    %116 = vector.broadcast %cst_77 : f32 to vector<32x8xf32>
    %117 = arith.select %115, %111, %116 : vector<32x8xi1>, vector<32x8xf32>
    %118 = arith.addf %107, %117 : vector<32x8xf32>
    %c1_78 = arith.constant 1 : index
    %c0_79 = arith.constant 0 : index
    %c0_80 = arith.constant 0 : index
    %119 = vector.load %arg10[%c1_78, %c0_79, %c0_80] : memref<3x8x8xf32, #tpu.memory_space<vmem>>, vector<1x8x8xf32>
    %120 = vector.shape_cast %119 : vector<1x8x8xf32> to vector<8x8xf32>
    %cst_81 = arith.constant dense<0.000000e+00> : vector<32x8xf32>
    %121 = tpu.matmul %101, %120, %cst_81 {dimension_numbers = #tpu.dot_dimension_numbers<[1], [0], [0], [1], [0, 0, 1, 1], [], []>} : vector<32x8xf32>, vector<8x8xf32>, vector<32x8xf32> -> vector<32x8xf32>
    %c2_i32_82 = arith.constant 2 : i32
    %122 = tpu.dynamic_rotate %121 by %c2_i32_82 dim 0 : vector<32x8xf32>, i32 -> vector<32x8xf32>
    %c2_i32_83 = arith.constant 2 : i32
    %123 = vector.broadcast %c2_i32_83 : i32 to vector<32x1xi32>
    %124 = arith.cmpi sge, %1, %123 : vector<32x1xi32>
    %cst_84 = arith.constant 0.000000e+00 : f32
    %125 = vector.shape_cast %124 : vector<32x1xi1> to vector<32x1xi1>
    %126 = vector.broadcast %125 : vector<32x1xi1> to vector<32x8xi1>
    %127 = vector.broadcast %cst_84 : f32 to vector<32x8xf32>
    %128 = arith.select %126, %122, %127 : vector<32x8xi1>, vector<32x8xf32>
    %129 = arith.addf %118, %128 : vector<32x8xf32>
    %cst_85 = arith.constant 0.000000e+00 : f32
    %130 = vector.broadcast %cst_85 : f32 to vector<32x8xf32>
    %131 = arith.maximumf %129, %130 : vector<32x8xf32>
    %132 = arith.addf %131, %71 : vector<32x8xf32>
    %cst_86 = arith.constant 0.000000e+00 : f32
    %133 = vector.broadcast %cst_86 : f32 to vector<32x8xf32>
    %134 = arith.maximumf %132, %133 : vector<32x8xf32>
    %135 = vector.shape_cast %134 : vector<32x8xf32> to vector<2x16x8xf32>
    %136 = vector.extract_strided_slice %135 {offsets = [0, 15, 0], sizes = [2, 1, 8], strides = [1, 1, 1]} : vector<2x16x8xf32> to vector<2x1x8xf32>
    %137 = vector.shape_cast %136 : vector<2x1x8xf32> to vector<2x8xf32>
    %c0_87 = arith.constant 0 : index
    %c0_88 = arith.constant 0 : index
    %138 = vector.load %arg12[%c0_87, %c0_88] : memref<8x3xf32, #tpu.memory_space<vmem>>, vector<8x3xf32>
    %cst_89 = arith.constant dense<0.000000e+00> : vector<2x3xf32>
    %139 = tpu.matmul %137, %138, %cst_89 {dimension_numbers = #tpu.dot_dimension_numbers<[1], [0], [0], [1], [0, 0, 1, 1], [], []>} : vector<2x8xf32>, vector<8x3xf32>, vector<2x3xf32> -> vector<2x3xf32>
    %c0_90 = arith.constant 0 : index
    %c0_91 = arith.constant 0 : index
    %140 = vector.load %arg13[%c0_90, %c0_91] : memref<1x3xf32, #tpu.memory_space<vmem>>, vector<1x3xf32>
    %141 = vector.broadcast %140 : vector<1x3xf32> to vector<2x3xf32>
    %142 = arith.addf %139, %141 : vector<2x3xf32>
    %c0_92 = arith.constant 0 : index
    %c0_93 = arith.constant 0 : index
    %c0_94 = arith.constant 0 : index
    %143 = vector.load %arg14[%c0_92, %c0_93, %c0_94] : memref<1x2x3xf32, #tpu.memory_space<vmem>>, vector<1x2x3xf32>
    %144 = vector.shape_cast %143 : vector<1x2x3xf32> to vector<2x3xf32>
    %145 = vector.shape_cast %142 : vector<2x3xf32> to vector<1x2x3xf32>
    tpu.vector_store %arg14[%c0_92, %c0_93, %c0_94], %145 {strides = array<i32>} : memref<1x2x3xf32, #tpu.memory_space<vmem>>, vector<1x2x3xf32>,
    return
  }
  func.func @transform_0(%arg0: i32) -> (i32, i32, i32) {
    %c0_i32 = arith.constant 0 : i32
    %c0_i32_0 = arith.constant 0 : i32
    %c0_i32_1 = arith.constant 0 : i32
    return %arg0, %c0_i32, %c0_i32_0 : i32, i32, i32
  }
  func.func @transform_1(%arg0: i32) -> (i32, i32, i32) {
    %c0_i32 = arith.constant 0 : i32
    %c0_i32_0 = arith.constant 0 : i32
    %c0_i32_1 = arith.constant 0 : i32
    %c0_i32_2 = arith.constant 0 : i32
    return %c0_i32, %c0_i32_0, %c0_i32_1 : i32, i32, i32
  }
  func.func @transform_2(%arg0: i32) -> (i32, i32) {
    %c0_i32 = arith.constant 0 : i32
    %c0_i32_0 = arith.constant 0 : i32
    %c0_i32_1 = arith.constant 0 : i32
    return %c0_i32, %c0_i32_0 : i32, i32
  }
  func.func @transform_3(%arg0: i32) -> (i32, i32, i32) {
    %c0_i32 = arith.constant 0 : i32
    %c0_i32_0 = arith.constant 0 : i32
    %c0_i32_1 = arith.constant 0 : i32
    %c0_i32_2 = arith.constant 0 : i32
    return %c0_i32, %c0_i32_0, %c0_i32_1 : i32, i32, i32
  }
  func.func @transform_4(%arg0: i32) -> (i32, i32) {
    %c0_i32 = arith.constant 0 : i32
    %c0_i32_0 = arith.constant 0 : i32
    %c0_i32_1 = arith.constant 0 : i32
    return %c0_i32, %c0_i32_0 : i32, i32
  }
  func.func @transform_5(%arg0: i32) -> (i32, i32) {
    %c0_i32 = arith.constant 0 : i32
    %c0_i32_0 = arith.constant 0 : i32
    %c0_i32_1 = arith.constant 0 : i32
    return %c0_i32, %c0_i32_0 : i32, i32
  }
  func.func @transform_6(%arg0: i32) -> (i32, i32) {
    %c0_i32 = arith.constant 0 : i32
    %c0_i32_0 = arith.constant 0 : i32
    %c0_i32_1 = arith.constant 0 : i32
    return %c0_i32, %c0_i32_0 : i32, i32
  }
  func.func @transform_7(%arg0: i32) -> (i32, i32, i32) {
    %c0_i32 = arith.constant 0 : i32
    %c0_i32_0 = arith.constant 0 : i32
    %c0_i32_1 = arith.constant 0 : i32
    %c0_i32_2 = arith.constant 0 : i32
    return %c0_i32, %c0_i32_0, %c0_i32_1 : i32, i32, i32
  }
  func.func @transform_8(%arg0: i32) -> (i32, i32) {
    %c0_i32 = arith.constant 0 : i32
    %c0_i32_0 = arith.constant 0 : i32
    %c0_i32_1 = arith.constant 0 : i32
    return %c0_i32, %c0_i32_0 : i32, i32
  }
  func.func @transform_9(%arg0: i32) -> (i32, i32, i32) {
    %c0_i32 = arith.constant 0 : i32
    %c0_i32_0 = arith.constant 0 : i32
    %c0_i32_1 = arith.constant 0 : i32
    %c0_i32_2 = arith.constant 0 : i32
    return %c0_i32, %c0_i32_0, %c0_i32_1 : i32, i32, i32
  }
  func.func @transform_10(%arg0: i32) -> (i32, i32) {
    %c0_i32 = arith.constant 0 : i32
    %c0_i32_0 = arith.constant 0 : i32
    %c0_i32_1 = arith.constant 0 : i32
    return %c0_i32, %c0_i32_0 : i32, i32
  }
  func.func @transform_11(%arg0: i32) -> (i32, i32) {
    %c0_i32 = arith.constant 0 : i32
    %c0_i32_0 = arith.constant 0 : i32
    %c0_i32_1 = arith.constant 0 : i32
    return %c0_i32, %c0_i32_0 : i32, i32
  }
  func.func @transform_12(%arg0: i32) -> (i32, i32) {
    %c0_i32 = arith.constant 0 : i32
    %c0_i32_0 = arith.constant 0 : i32
    %c0_i32_1 = arith.constant 0 : i32
    return %c0_i32, %c0_i32_0 : i32, i32
  }
  func.func @transform_13(%arg0: i32) -> (i32, i32, i32) {
    %c0_i32 = arith.constant 0 : i32
    %c0_i32_0 = arith.constant 0 : i32
    %c0_i32_1 = arith.constant 0 : i32
    return %arg0, %c0_i32, %c0_i32_0 : i32, i32, i32
  }
}

</mosaic_0001>

<llo_original>
// kernel: tpu_custom_call.1
$region0: #{tpu_custom_call.1}
  #allocation0 [shape = 'u32[]', space=smem, size = 0x4, offset = 0x4, fixed_abs, tag = 'smem constant byte address 0x4 - core index']
  #allocation1 [shape = 'u32[144,128]{1,0:T(1,128)}', space=vmem, size = 0x12000, scoped, tag = 'internal scratch']
  %s0 = inlined_call_operand.vmem [shape: f32[2,16,4], index: 0, kind: input, shape index: {}]
  %s1 = inlined_call_operand.hbm [shape: f32[3,4,8], index: 1, kind: input, shape index: {}]
  %s2 = inlined_call_operand.vmem [shape: f32[1,8], index: 2, kind: input, shape index: {}]
  %s3 = inlined_call_operand.vmem [shape: f32[3,8,8], index: 3, kind: input, shape index: {}]
  %s4 = inlined_call_operand.vmem [shape: f32[1,8], index: 4, kind: input, shape index: {}]
  %s5 = inlined_call_operand.hbm [shape: f32[4,8], index: 5, kind: input, shape index: {}]
  %s6 = inlined_call_operand.hbm [shape: f32[1,8], index: 6, kind: input, shape index: {}]
  %s7 = inlined_call_operand.vmem [shape: f32[3,8,8], index: 7, kind: input, shape index: {}]
  %s8 = inlined_call_operand.vmem [shape: f32[1,8], index: 8, kind: input, shape index: {}]
  %s9 = inlined_call_operand.vmem [shape: f32[3,8,8], index: 9, kind: input, shape index: {}]
  %s10 = inlined_call_operand.vmem [shape: f32[1,8], index: 10, kind: input, shape index: {}]
  %s11 = inlined_call_operand.vmem [shape: f32[8,3], index: 11, kind: input, shape index: {}]
  %s12 = inlined_call_operand.vmem [shape: f32[1,3], index: 12, kind: input, shape index: {}]
  %s13 = inlined_call_operand.hbm [shape: f32[1,2,3], index: 13, kind: output, shape index: {}]
  %s14 = sld [smem:[#allocation0]]
  $region74: #{tpu_custom_call.1} parent=0
    _
  %s16 = ssub.s32 1, %s14
  %s17 = scalar_select 0, %s16, %s14
  $region1: #{tpu_custom_call.1} parent=0
    #allocation2 [shape = 'u8[6144]{0}', space=vmem, size = 0x1800, scoped, tag = 'input window, operand 1, single buffered']
    #allocation3 [shape = 's32[1]{0}', space=sflag, size = 0x4, scoped, tag = 'scoped memory for tpu_custom_call.1']
    #allocation4 [shape = 's32[1]{0}', space=sflag, size = 0x4, scoped, tag = 'scoped memory for tpu_custom_call.1']
    #allocation5 [shape = 'u8[2048]{0}', space=vmem, size = 0x800, scoped, tag = 'input window, operand 5, single buffered']
    #allocation6 [shape = 's32[1]{0}', space=sflag, size = 0x4, scoped, tag = 'scoped memory for tpu_custom_call.1']
    #allocation7 [shape = 'u8[512]{0}', space=vmem, size = 0x400, scoped, tag = 'input window, operand 6, single buffered']
    #allocation8 [shape = 'u8[1024]{0}', space=vmem, size = 0x400, scoped, tag = 'output window, operand 0, single buffered']
    %18 = vsyncpa [#allocation3], 0
    %19 = vsyncpa [#allocation6], 0
    %20 = vsyncpa [#allocation4], 0
    // Predicated region
    $region2: #{tpu_custom_call.1} parent=1 // pred_check
      _
    $region3: #{tpu_custom_call.1} parent=1 // pred_check_branch
      %22 = sbr.rel (0) target = $region5
    $region4: #{tpu_custom_call.1} parent=1 // pred_region
      _
    $region5: #{tpu_custom_call.1} parent=1 // pred_fallthru
      _
    // Predicated region
    $region6: #{tpu_custom_call.1} parent=1 // pred_check
      _
    $region7: #{tpu_custom_call.1} parent=1 // pred_check_branch
      %24 = sbr.rel (0) target = $region9
    $region8: #{tpu_custom_call.1} parent=1 // pred_region
      %s26 = ssub.s32 192, 192
      %27 = vsyncadd [#allocation3], %s26
      %s28 = sshll.u32 [#allocation2], 4
      %s29 = int_to_ptr.vmem [resolvable:$true] %s28
      %34 = dma.hbm_to_vmem [thread:$0]  %s1, 192, %s29, [#allocation3], 64, 64, 4
    $region9: #{tpu_custom_call.1} parent=1 // pred_fallthru
      _
    // Predicated region
    $region10: #{tpu_custom_call.1} parent=1 // pred_check
      _
    $region11: #{tpu_custom_call.1} parent=1 // pred_check_branch
      %36 = sbr.rel (0) target = $region13
    $region12: #{tpu_custom_call.1} parent=1 // pred_region
      _
    $region13: #{tpu_custom_call.1} parent=1 // pred_fallthru
      _
    // Predicated region
    $region14: #{tpu_custom_call.1} parent=1 // pred_check
      _
    $region15: #{tpu_custom_call.1} parent=1 // pred_check_branch
      %38 = sbr.rel (0) target = $region17
    $region16: #{tpu_custom_call.1} parent=1 // pred_region
      _
    $region17: #{tpu_custom_call.1} parent=1 // pred_fallthru
      _
    // Predicated region
    $region18: #{tpu_custom_call.1} parent=1 // pred_check
      _
    $region19: #{tpu_custom_call.1} parent=1 // pred_check_branch
      %40 = sbr.rel (0) target = $region21
    $region20: #{tpu_custom_call.1} parent=1 // pred_region
      _
    $region21: #{tpu_custom_call.1} parent=1 // pred_fallthru
      _
    // Predicated region
    $region22: #{tpu_custom_call.1} parent=1 // pred_check
      _
    $region23: #{tpu_custom_call.1} parent=1 // pred_check_branch
      %42 = sbr.rel (0) target = $region25
    $region24: #{tpu_custom_call.1} parent=1 // pred_region
      %s44 = ssub.s32 64, 64
      %45 = vsyncadd [#allocation6], %s44
      %s47 = sshll.u32 [#allocation5], 4
      %s48 = int_to_ptr.vmem [resolvable:$true] %s47
      %50 = dma.hbm_to_vmem [thread:$0]  %s5, 64, %s48, [#allocation6]
    $region25: #{tpu_custom_call.1} parent=1 // pred_fallthru
      _
    // Predicated region
    $region26: #{tpu_custom_call.1} parent=1 // pred_check
      _
    $region27: #{tpu_custom_call.1} parent=1 // pred_check_branch
      %52 = sbr.rel (0) target = $region29
    $region28: #{tpu_custom_call.1} parent=1 // pred_region
      %s54 = ssub.s32 16, 16
      %55 = vsyncadd [#allocation6], %s54
      %s57 = sshll.u32 [#allocation7], 4
      %s58 = int_to_ptr.vmem [resolvable:$true] %s57
      %60 = dma.hbm_to_vmem [thread:$0]  %s6, 16, %s58, [#allocation6]
    $region29: #{tpu_custom_call.1} parent=1 // pred_fallthru
      _
    // Predicated region
    $region30: #{tpu_custom_call.1} parent=1 // pred_check
      _
    $region31: #{tpu_custom_call.1} parent=1 // pred_check_branch
      %62 = sbr.rel (0) target = $region33
    $region32: #{tpu_custom_call.1} parent=1 // pred_region
      _
    $region33: #{tpu_custom_call.1} parent=1 // pred_fallthru
      _
    // Predicated region
    $region34: #{tpu_custom_call.1} parent=1 // pred_check
      _
    $region35: #{tpu_custom_call.1} parent=1 // pred_check_branch
      %64 = sbr.rel (0) target = $region37
    $region36: #{tpu_custom_call.1} parent=1 // pred_region
      _
    $region37: #{tpu_custom_call.1} parent=1 // pred_fallthru
      _
    // Predicated region
    $region38: #{tpu_custom_call.1} parent=1 // pred_check
      _
    $region39: #{tpu_custom_call.1} parent=1 // pred_check_branch
      %66 = sbr.rel (0) target = $region41
    $region40: #{tpu_custom_call.1} parent=1 // pred_region
      _
    $region41: #{tpu_custom_call.1} parent=1 // pred_fallthru
      _
    // Predicated region
    $region42: #{tpu_custom_call.1} parent=1 // pred_check
      _
    $region43: #{tpu_custom_call.1} parent=1 // pred_check_branch
      %68 = sbr.rel (0) target = $region45
    $region44: #{tpu_custom_call.1} parent=1 // pred_region
      _
    $region45: #{tpu_custom_call.1} parent=1 // pred_fallthru
      _
    // Predicated region
    $region46: #{tpu_custom_call.1} parent=1 // pred_check
      _
    $region47: #{tpu_custom_call.1} parent=1 // pred_check_branch
      %70 = sbr.rel (0) target = $region49
    $region48: #{tpu_custom_call.1} parent=1 // pred_region
      _
    $region49: #{tpu_custom_call.1} parent=1 // pred_fallthru
      _
    // Predicated region
    $region50: #{tpu_custom_call.1} parent=1 // pred_check
      _
    $region51: #{tpu_custom_call.1} parent=1 // pred_check_branch
      %72 = sbr.rel (0) target = $region53
    $region52: #{tpu_custom_call.1} parent=1 // pred_region
      _
    $region53: #{tpu_custom_call.1} parent=1 // pred_fallthru
      _
    // Predicated region
    $region54: #{tpu_custom_call.1} parent=1 // pred_check
      _
    $region55: #{tpu_custom_call.1} parent=1 // pred_check_branch
      %74 = sbr.rel (0) target = $region57
    $region56: #{tpu_custom_call.1} parent=1 // pred_region
      %75 = dma.done [#allocation3], 192
    $region57: #{tpu_custom_call.1} parent=1 // pred_fallthru
      _
    // Predicated region
    $region58: #{tpu_custom_call.1} parent=1 // pred_check
      _
    $region59: #{tpu_custom_call.1} parent=1 // pred_check_branch
      %77 = sbr.rel (0) target = $region61
    $region60: #{tpu_custom_call.1} parent=1 // pred_region
      %78 = dma.done [#allocation6], 64
    $region61: #{tpu_custom_call.1} parent=1 // pred_fallthru
      _
    // Predicated region
    $region62: #{tpu_custom_call.1} parent=1 // pred_check
      _
    $region63: #{tpu_custom_call.1} parent=1 // pred_check_branch
      %80 = sbr.rel (0) target = $region65
    $region64: #{tpu_custom_call.1} parent=1 // pred_region
      %81 = dma.done [#allocation6], 16
    $region65: #{tpu_custom_call.1} parent=1 // pred_fallthru
      _
    %v82 = vlaneseq
    %v83 = vshrl.u32 %v82, 7
    %v84 = vadd.s32 %v83, 8
    %v85 = vld [vmem:[%s0] sm:$0xff]
    %v86 = vld [vmem:[%s0 + $0x8] sm:$0xff]
    %v87 = vld [vmem:[%s0 + $0x10] sm:$0xff]
    %v88 = vld [vmem:[%s0 + $0x18] sm:$0xff]
    %v89 = vld [vmem:[#allocation5] sm:$0xf]
    %v90 = vld [vmem:[#allocation7] sm:$0x1]
    %v92 = vlaneseq
    %v93 = vshrl.u32 %v92, 7
    %v94 = vsub.s32 0, %v93
    %v95 = vrot.slane %v90, %v94
    %vm97 = vcmask 31744
    %v99 = vsel %vm97, %v85, 0
    %v102 = vsel %vm97, %v86, 0
    %v105 = vsel %vm97, %v87, 0
    %v108 = vsel %vm97, %v88, 0
    %vm110 = vcmask 1043456
    %v112 = vsel %vm110, %v89, 0
    %114 = vmatprep.subr.mxu0 0.0
    %115 = vmatpush1.msra.mxu0 %v112
    %116 = vmatprep.subr.mxu0 0.0
    %117 = vmatpush1.msra.mxu0 0.0
    %118 = vmatprep.subr.mxu0 0.0
    %119 = vmatpush1.msra.mxu0 0.0
    %120 = vmatprep.subr.mxu0 0.0
    %121 = vmatpush1.msra.mxu0 0.0
    %122 = vmatprep.subr.mxu0 0.0
    %123 = vmatpush1.msra.mxu0 0.0
    %124 = vmatprep.subr.mxu0 0.0
    %125 = vmatpush1.msra.mxu0 0.0
    %126 = vmatprep.subr.mxu0 0.0
    %127 = vmatpush1.msra.mxu0 0.0
    %128 = vmatprep.subr.mxu0 0.0
    %129 = vmatpush1.msra.mxu0 0.0
    %130 = vmatprep.subr.mxu0 0.0
    %131 = vmatpush1.msra.mxu0 0.0
    %132 = vmatprep.subr.mxu0 0.0
    %133 = vmatpush1.msra.mxu0 0.0
    %134 = vmatprep.subr.mxu0 0.0
    %135 = vmatpush1.msra.mxu0 0.0
    %136 = vmatprep.subr.mxu0 0.0
    %137 = vmatpush1.msra.mxu0 0.0
    %138 = vmatprep.subr.mxu0 0.0
    %139 = vmatpush1.msra.mxu0 0.0
    %140 = vmatprep.subr.mxu0 0.0
    %141 = vmatpush1.msra.mxu0 0.0
    %142 = vmatprep.subr.mxu0 0.0
    %143 = vmatpush1.msra.mxu0 0.0
    %144 = vmatprep.subr.mxu0 0.0
    %145 = vmatpush1.msra.mxu0 0.0
    %146 = vmatprep.subr.mxu0 0.0
    %147 = vmatpush1.msra.mxu0 0.0
    %148 = vmatprep.subr.mxu0 0.0
    %149 = vmatpush1.msra.mxu0 0.0
    %150 = vmatprep.subr.mxu0 0.0
    %151 = vmatpush1.msra.mxu0 0.0
    %152 = vmatprep.subr.mxu0 0.0
    %153 = vmatpush1.msra.mxu0 0.0
    %154 = vmatprep.subr.mxu0 0.0
    %155 = vmatpush1.msra.mxu0 0.0
    %156 = vmatprep.subr.mxu0 0.0
    %157 = vmatpush1.msra.mxu0 0.0
    %158 = vmatprep.subr.mxu0 0.0
    %159 = vmatpush1.msra.mxu0 0.0
    %160 = vmatprep.subr.mxu0 0.0
    %161 = vmatpush1.msra.mxu0 0.0
    %162 = vmatprep.subr.mxu0 0.0
    %163 = vmatpush1.msra.mxu0 0.0
    %164 = vmatprep.subr.mxu0 0.0
    %165 = vmatpush1.msra.mxu0 0.0
    %166 = vmatprep.subr.mxu0 0.0
    %167 = vmatpush1.msra.mxu0 0.0
    %168 = vmatprep.subr.mxu0 0.0
    %169 = vmatpush1.msra.mxu0 0.0
    %170 = vmatprep.subr.mxu0 0.0
    %171 = vmatpush1.msra.mxu0 0.0
    %172 = vmatprep.subr.mxu0 0.0
    %173 = vmatpush1.msra.mxu0 0.0
    %174 = vmatprep.subr.mxu0 0.0
    %175 = vmatpush1.msra.mxu0 0.0
    %176 = vmatprep.subr.mxu0 0.0
    %177 = vmatpush1.msra.mxu0 0.0
    %178 = vmatprep.mubr.f32.mxu0 0.0
    %179 = vmatmul.mubr.f32.gmra.mrb[0].mxu0 %v99
    %v180 = vpop.f32.mrb[0].mxu0
    %v181 = vadd.f32 %v95, %v180
    %v182 = vpop.f32.mrb[0].mxu0
    %183 = vmatprep.mubr.f32.mxu0 0.0
    %184 = vmatmul.mubr.f32.gmra.mrb[0].mxu0 %v102
    %v185 = vpop.f32.mrb[0].mxu0
    %v186 = vadd.f32 %v95, %v185
    %v187 = vpop.f32.mrb[0].mxu0
    %188 = vmatprep.mubr.f32.mxu0 0.0
    %189 = vmatmul.mubr.f32.gmra.mrb[0].mxu0 %v105
    %v190 = vpop.f32.mrb[0].mxu0
    %v191 = vadd.f32 %v95, %v190
    %v192 = vpop.f32.mrb[0].mxu0
    %193 = vmatprep.mubr.f32.mxu0 0.0
    %194 = vmatmul.mubr.f32.gmra.mrb[0].mxu0 %v108
    %v195 = vpop.f32.mrb[0].mxu0
    %v196 = vadd.f32 %v95, %v195
    %v197 = vpop.f32.mrb[0].mxu0
    %198 = vdwg.mxu0
    %s199 = scalar_lea.vmem [#allocation2], 8
    %v200 = vld [vmem:[%s199] sm:$0xf]
    %v201 = vld [vmem:[%s2] sm:$0x1]
    %v203 = vlaneseq
    %v204 = vshrl.u32 %v203, 7
    %v205 = vsub.s32 0, %v204
    %v206 = vrot.slane %v201, %v205
    %v209 = vsel %vm110, %v200, 0
    %211 = vmatprep.subr.mxu0 0.0
    %212 = vmatpush1.msra.mxu0 %v209
    %213 = vmatprep.subr.mxu0 0.0
    %214 = vmatpush1.msra.mxu0 0.0
    %215 = vmatprep.subr.mxu0 0.0
    %216 = vmatpush1.msra.mxu0 0.0
    %217 = vmatprep.subr.mxu0 0.0
    %218 = vmatpush1.msra.mxu0 0.0
    %219 = vmatprep.subr.mxu0 0.0
    %220 = vmatpush1.msra.mxu0 0.0
    %221 = vmatprep.subr.mxu0 0.0
    %222 = vmatpush1.msra.mxu0 0.0
    %223 = vmatprep.subr.mxu0 0.0
    %224 = vmatpush1.msra.mxu0 0.0
    %225 = vmatprep.subr.mxu0 0.0
    %226 = vmatpush1.msra.mxu0 0.0
    %227 = vmatprep.subr.mxu0 0.0
    %228 = vmatpush1.msra.mxu0 0.0
    %229 = vmatprep.subr.mxu0 0.0
    %230 = vmatpush1.msra.mxu0 0.0
    %231 = vmatprep.subr.mxu0 0.0
    %232 = vmatpush1.msra.mxu0 0.0
    %233 = vmatprep.subr.mxu0 0.0
    %234 = vmatpush1.msra.mxu0 0.0
    %235 = vmatprep.subr.mxu0 0.0
    %236 = vmatpush1.msra.mxu0 0.0
    %237 = vmatprep.subr.mxu0 0.0
    %238 = vmatpush1.msra.mxu0 0.0
    %239 = vmatprep.subr.mxu0 0.0
    %240 = vmatpush1.msra.mxu0 0.0
    %241 = vmatprep.subr.mxu0 0.0
    %242 = vmatpush1.msra.mxu0 0.0
    %243 = vmatprep.subr.mxu0 0.0
    %244 = vmatpush1.msra.mxu0 0.0
    %245 = vmatprep.subr.mxu0 0.0
    %246 = vmatpush1.msra.mxu0 0.0
    %247 = vmatprep.subr.mxu0 0.0
    %248 = vmatpush1.msra.mxu0 0.0
    %249 = vmatprep.subr.mxu0 0.0
    %250 = vmatpush1.msra.mxu0 0.0
    %251 = vmatprep.subr.mxu0 0.0
    %252 = vmatpush1.msra.mxu0 0.0
    %253 = vmatprep.subr.mxu0 0.0
    %254 = vmatpush1.msra.mxu0 0.0
    %255 = vmatprep.subr.mxu0 0.0
    %256 = vmatpush1.msra.mxu0 0.0
    %257 = vmatprep.subr.mxu0 0.0
    %258 = vmatpush1.msra.mxu0 0.0
    %259 = vmatprep.subr.mxu0 0.0
    %260 = vmatpush1.msra.mxu0 0.0
    %261 = vmatprep.subr.mxu0 0.0
    %262 = vmatpush1.msra.mxu0 0.0
    %263 = vmatprep.subr.mxu0 0.0
    %264 = vmatpush1.msra.mxu0 0.0
    %265 = vmatprep.subr.mxu0 0.0
    %266 = vmatpush1.msra.mxu0 0.0
    %267 = vmatprep.subr.mxu0 0.0
    %268 = vmatpush1.msra.mxu0 0.0
    %269 = vmatprep.subr.mxu0 0.0
    %270 = vmatpush1.msra.mxu0 0.0
    %271 = vmatprep.subr.mxu0 0.0
    %272 = vmatpush1.msra.mxu0 0.0
    %273 = vmatprep.subr.mxu0 0.0
    %274 = vmatpush1.msra.mxu0 0.0
    %275 = vmatprep.mubr.f32.mxu0 0.0
    %276 = vmatmul.mubr.f32.gmra.mrb[0].mxu0 %v99
    %v277 = vpop.f32.mrb[0].mxu0
    %v278 = vadd.f32 %v206, %v277
    %v279 = vpop.f32.mrb[0].mxu0
    %280 = vmatprep.mubr.f32.mxu0 0.0
    %281 = vmatmul.mubr.f32.gmra.mrb[0].mxu0 %v102
    %v282 = vpop.f32.mrb[0].mxu0
    %v283 = vadd.f32 %v206, %v282
    %v284 = vpop.f32.mrb[0].mxu0
    %285 = vmatprep.mubr.f32.mxu0 0.0
    %286 = vmatmul.mubr.f32.gmra.mrb[0].mxu0 %v105
    %v287 = vpop.f32.mrb[0].mxu0
    %v288 = vadd.f32 %v206, %v287
    %v289 = vpop.f32.mrb[0].mxu0
    %290 = vmatprep.mubr.f32.mxu0 0.0
    %291 = vmatmul.mubr.f32.gmra.mrb[0].mxu0 %v108
    %v292 = vpop.f32.mrb[0].mxu0
    %v293 = vadd.f32 %v206, %v292
    %v294 = vpop.f32.mrb[0].mxu0
    %295 = vdwg.mxu0
    %v296 = vld [vmem:[#allocation2] sm:$0xf]
    %v298 = vsel %vm110, %v296, 0
    %300 = vmatprep.subr.mxu0 0.0
    %301 = vmatpush1.msra.mxu0 %v298
    %302 = vmatprep.subr.mxu0 0.0
    %303 = vmatpush1.msra.mxu0 0.0
    %304 = vmatprep.subr.mxu0 0.0
    %305 = vmatpush1.msra.mxu0 0.0
    %306 = vmatprep.subr.mxu0 0.0
    %307 = vmatpush1.msra.mxu0 0.0
    %308 = vmatprep.subr.mxu0 0.0
    %309 = vmatpush1.msra.mxu0 0.0
    %310 = vmatprep.subr.mxu0 0.0
    %311 = vmatpush1.msra.mxu0 0.0
    %312 = vmatprep.subr.mxu0 0.0
    %313 = vmatpush1.msra.mxu0 0.0
    %314 = vmatprep.subr.mxu0 0.0
    %315 = vmatpush1.msra.mxu0 0.0
    %316 = vmatprep.subr.mxu0 0.0
    %317 = vmatpush1.msra.mxu0 0.0
    %318 = vmatprep.subr.mxu0 0.0
    %319 = vmatpush1.msra.mxu0 0.0
    %320 = vmatprep.subr.mxu0 0.0
    %321 = vmatpush1.msra.mxu0 0.0
    %322 = vmatprep.subr.mxu0 0.0
    %323 = vmatpush1.msra.mxu0 0.0
    %324 = vmatprep.subr.mxu0 0.0
    %325 = vmatpush1.msra.mxu0 0.0
    %326 = vmatprep.subr.mxu0 0.0
    %327 = vmatpush1.msra.mxu0 0.0
    %328 = vmatprep.subr.mxu0 0.0
    %329 = vmatpush1.msra.mxu0 0.0
    %330 = vmatprep.subr.mxu0 0.0
    %331 = vmatpush1.msra.mxu0 0.0
    %332 = vmatprep.subr.mxu0 0.0
    %333 = vmatpush1.msra.mxu0 0.0
    %334 = vmatprep.subr.mxu0 0.0
    %335 = vmatpush1.msra.mxu0 0.0
    %336 = vmatprep.subr.mxu0 0.0
    %337 = vmatpush1.msra.mxu0 0.0
    %338 = vmatprep.subr.mxu0 0.0
    %339 = vmatpush1.msra.mxu0 0.0
    %340 = vmatprep.subr.mxu0 0.0
    %341 = vmatpush1.msra.mxu0 0.0
    %342 = vmatprep.subr.mxu0 0.0
    %343 = vmatpush1.msra.mxu0 0.0
    %344 = vmatprep.subr.mxu0 0.0
    %345 = vmatpush1.msra.mxu0 0.0
    %346 = vmatprep.subr.mxu0 0.0
    %347 = vmatpush1.msra.mxu0 0.0
    %348 = vmatprep.subr.mxu0 0.0
    %349 = vmatpush1.msra.mxu0 0.0
    %350 = vmatprep.subr.mxu0 0.0
    %351 = vmatpush1.msra.mxu0 0.0
    %352 = vmatprep.subr.mxu0 0.0
    %353 = vmatpush1.msra.mxu0 0.0
    %354 = vmatprep.subr.mxu0 0.0
    %355 = vmatpush1.msra.mxu0 0.0
    %356 = vmatprep.subr.mxu0 0.0
    %357 = vmatpush1.msra.mxu0 0.0
    %358 = vmatprep.subr.mxu0 0.0
    %359 = vmatpush1.msra.mxu0 0.0
    %360 = vmatprep.subr.mxu0 0.0
    %361 = vmatpush1.msra.mxu0 0.0
    %362 = vmatprep.subr.mxu0 0.0
    %363 = vmatpush1.msra.mxu0 0.0
    %364 = vmatprep.mubr.f32.mxu0 0.0
    %365 = vmatmul.mubr.f32.gmra.mrb[0].mxu0 %v99
    %v366 = vpop.f32.mrb[0].mxu0
    %v367 = vadd.f32 0.0, %v366
    %v368 = vpop.f32.mrb[0].mxu0
    %369 = vmatprep.mubr.f32.mxu0 0.0
    %370 = vmatmul.mubr.f32.gmra.mrb[0].mxu0 %v102
    %v371 = vpop.f32.mrb[0].mxu0
    %v372 = vadd.f32 0.0, %v371
    %v373 = vpop.f32.mrb[0].mxu0
    %374 = vmatprep.mubr.f32.mxu0 0.0
    %375 = vmatmul.mubr.f32.gmra.mrb[0].mxu0 %v105
    %v376 = vpop.f32.mrb[0].mxu0
    %v377 = vadd.f32 0.0, %v376
    %v378 = vpop.f32.mrb[0].mxu0
    %379 = vmatprep.mubr.f32.mxu0 0.0
    %380 = vmatmul.mubr.f32.gmra.mrb[0].mxu0 %v108
    %v381 = vpop.f32.mrb[0].mxu0
    %v382 = vadd.f32 0.0, %v381
    %v383 = vpop.f32.mrb[0].mxu0
    %384 = vdwg.mxu0
    %v385 = vrot.slane %v367, 6
    %v386 = vrot.slane %v372, 6
    %v387 = vrot.slane %v377, 6
    %v388 = vrot.slane %v382, 6
    %vm389 = vcmp.lt.s32.totalorder %v83, 2
    %v390 = vsel %vm389, %v387, %v388
    %v391 = vsel %vm389, %v386, %v387
    %v392 = vsel %vm389, %v385, %v386
    %v393 = vsel %vm389, %v388, %v385
    %vm394 = vcmp.ge.s32.totalorder %v83, 2
    %vm395 = vcmp.ge.s32.totalorder %v84, 2
    %v396 = vsel %vm394, 1, 0
    %v397 = vsel %vm395, 1, 0
    %vm398 = vcmp.eq.s32.totalorder %v396, 1
    %vm399 = vcmp.eq.s32.totalorder %v397, 1
    %v400 = vsel %vm398, %v393, 0.0
    %v401 = vsel %vm399, %v392, 0.0
    %v402 = vsel %vm398, %v391, 0.0
    %v403 = vsel %vm399, %v390, 0.0
    %v404 = vadd.f32 %v278, %v400
    %v405 = vadd.f32 %v283, %v401
    %v406 = vadd.f32 %v288, %v402
    %v407 = vadd.f32 %v293, %v403
    %s408 = scalar_lea.vmem [#allocation2], 4
    %v409 = vld [vmem:[%s408] sm:$0xf]
    %v411 = vsel %vm110, %v409, 0
    %413 = vmatprep.subr.mxu0 0.0
    %414 = vmatpush1.msra.mxu0 %v411
    %415 = vmatprep.subr.mxu0 0.0
    %416 = vmatpush1.msra.mxu0 0.0
    %417 = vmatprep.subr.mxu0 0.0
    %418 = vmatpush1.msra.mxu0 0.0
    %419 = vmatprep.subr.mxu0 0.0
    %420 = vmatpush1.msra.mxu0 0.0
    %421 = vmatprep.subr.mxu0 0.0
    %422 = vmatpush1.msra.mxu0 0.0
    %423 = vmatprep.subr.mxu0 0.0
    %424 = vmatpush1.msra.mxu0 0.0
    %425 = vmatprep.subr.mxu0 0.0
    %426 = vmatpush1.msra.mxu0 0.0
    %427 = vmatprep.subr.mxu0 0.0
    %428 = vmatpush1.msra.mxu0 0.0
    %429 = vmatprep.subr.mxu0 0.0
    %430 = vmatpush1.msra.mxu0 0.0
    %431 = vmatprep.subr.mxu0 0.0
    %432 = vmatpush1.msra.mxu0 0.0
    %433 = vmatprep.subr.mxu0 0.0
    %434 = vmatpush1.msra.mxu0 0.0
    %435 = vmatprep.subr.mxu0 0.0
    %436 = vmatpush1.msra.mxu0 0.0
    %437 = vmatprep.subr.mxu0 0.0
    %438 = vmatpush1.msra.mxu0 0.0
    %439 = vmatprep.subr.mxu0 0.0
    %440 = vmatpush1.msra.mxu0 0.0
    %441 = vmatprep.subr.mxu0 0.0
    %442 = vmatpush1.msra.mxu0 0.0
    %443 = vmatprep.subr.mxu0 0.0
    %444 = vmatpush1.msra.mxu0 0.0
    %445 = vmatprep.subr.mxu0 0.0
    %446 = vmatpush1.msra.mxu0 0.0
    %447 = vmatprep.subr.mxu0 0.0
    %448 = vmatpush1.msra.mxu0 0.0
    %449 = vmatprep.subr.mxu0 0.0
    %450 = vmatpush1.msra.mxu0 0.0
    %451 = vmatprep.subr.mxu0 0.0
    %452 = vmatpush1.msra.mxu0 0.0
    %453 = vmatprep.subr.mxu0 0.0
    %454 = vmatpush1.msra.mxu0 0.0
    %455 = vmatprep.subr.mxu0 0.0
    %456 = vmatpush1.msra.mxu0 0.0
    %457 = vmatprep.subr.mxu0 0.0
    %458 = vmatpush1.msra.mxu0 0.0
    %459 = vmatprep.subr.mxu0 0.0
    %460 = vmatpush1.msra.mxu0 0.0
    %461 = vmatprep.subr.mxu0 0.0
    %462 = vmatpush1.msra.mxu0 0.0
    %463 = vmatprep.subr.mxu0 0.0
    %464 = vmatpush1.msra.mxu0 0.0
    %465 = vmatprep.subr.mxu0 0.0
    %466 = vmatpush1.msra.mxu0 0.0
    %467 = vmatprep.subr.mxu0 0.0
    %468 = vmatpush1.msra.mxu0 0.0
    %469 = vmatprep.subr.mxu0 0.0
    %470 = vmatpush1.msra.mxu0 0.0
    %471 = vmatprep.subr.mxu0 0.0
    %472 = vmatpush1.msra.mxu0 0.0
    %473 = vmatprep.subr.mxu0 0.0
    %474 = vmatpush1.msra.mxu0 0.0
    %475 = vmatprep.subr.mxu0 0.0
    %476 = vmatpush1.msra.mxu0 0.0
    %477 = vmatprep.mubr.f32.mxu0 0.0
    %478 = vmatmul.mubr.f32.gmra.mrb[0].mxu0 %v99
    %v479 = vpop.f32.mrb[0].mxu0
    %v480 = vadd.f32 0.0, %v479
    %v481 = vpop.f32.mrb[0].mxu0
    %482 = vmatprep.mubr.f32.mxu0 0.0
    %483 = vmatmul.mubr.f32.gmra.mrb[0].mxu0 %v102
    %v484 = vpop.f32.mrb[0].mxu0
    %v485 = vadd.f32 0.0, %v484
    %v486 = vpop.f32.mrb[0].mxu0
    %487 = vmatprep.mubr.f32.mxu0 0.0
    %488 = vmatmul.mubr.f32.gmra.mrb[0].mxu0 %v105
    %v489 = vpop.f32.mrb[0].mxu0
    %v490 = vadd.f32 0.0, %v489
    %v491 = vpop.f32.mrb[0].mxu0
    %492 = vmatprep.mubr.f32.mxu0 0.0
    %493 = vmatmul.mubr.f32.gmra.mrb[0].mxu0 %v108
    %v494 = vpop.f32.mrb[0].mxu0
    %v495 = vadd.f32 0.0, %v494
    %v496 = vpop.f32.mrb[0].mxu0
    %497 = vdwg.mxu0
    %v498 = vrot.slane %v480, 7
    %v499 = vrot.slane %v485, 7
    %v500 = vrot.slane %v490, 7
    %v501 = vrot.slane %v495, 7
    %vm502 = vcmp.lt.s32.totalorder %v83, 1
    %v503 = vsel %vm502, %v500, %v501
    %v504 = vsel %vm502, %v499, %v500
    %v505 = vsel %vm502, %v498, %v499
    %v506 = vsel %vm502, %v501, %v498
    %vm507 = vcmp.ge.s32.totalorder %v83, 1
    %vm508 = vcmp.ge.s32.totalorder %v84, 1
    %v509 = vsel %vm507, 1, 0
    %v510 = vsel %vm508, 1, 0
    %vm511 = vcmp.eq.s32.totalorder %v509, 1
    %vm512 = vcmp.eq.s32.totalorder %v510, 1
    %v513 = vsel %vm511, %v506, 0.0
    %v514 = vsel %vm512, %v505, 0.0
    %v515 = vsel %vm511, %v504, 0.0
    %v516 = vsel %vm512, %v503, 0.0
    %v517 = vadd.f32 %v404, %v513
    %v518 = vadd.f32 %v405, %v514
    %v519 = vadd.f32 %v406, %v515
    %v520 = vadd.f32 %v407, %v516
    %v521 = vmax.f32 %v517, 0.0
    %v522 = vmax.f32 %v518, 0.0
    %v523 = vmax.f32 %v519, 0.0
    %v524 = vmax.f32 %v520, 0.0
    %s525 = scalar_lea.vmem %s3, 16
    %v526 = vld [vmem:[%s525] sm:$0xff]
    %v527 = vld [vmem:[%s4] sm:$0x1]
    %v529 = vlaneseq
    %v530 = vshrl.u32 %v529, 7
    %v531 = vsub.s32 0, %v530
    %v532 = vrot.slane %v527, %v531
    %vm534 = vcmask 64512
    %v536 = vsel %vm534, %v521, 0
    %v539 = vsel %vm534, %v522, 0
    %v542 = vsel %vm534, %v523, 0
    %v545 = vsel %vm534, %v524, 0
    %547 = vmatprep.subr.mxu0 0.0
    %548 = vmatpush1.msra.mxu0 %v526
    %549 = vmatprep.subr.mxu0 0.0
    %550 = vmatpush1.msra.mxu0 0.0
    %551 = vmatprep.subr.mxu0 0.0
    %552 = vmatpush1.msra.mxu0 0.0
    %553 = vmatprep.subr.mxu0 0.0
    %554 = vmatpush1.msra.mxu0 0.0
    %555 = vmatprep.subr.mxu0 0.0
    %556 = vmatpush1.msra.mxu0 0.0
    %557 = vmatprep.subr.mxu0 0.0
    %558 = vmatpush1.msra.mxu0 0.0
    %559 = vmatprep.subr.mxu0 0.0
    %560 = vmatpush1.msra.mxu0 0.0
    %561 = vmatprep.subr.mxu0 0.0
    %562 = vmatpush1.msra.mxu0 0.0
    %563 = vmatprep.subr.mxu0 0.0
    %564 = vmatpush1.msra.mxu0 0.0
    %565 = vmatprep.subr.mxu0 0.0
    %566 = vmatpush1.msra.mxu0 0.0
    %567 = vmatprep.subr.mxu0 0.0
    %568 = vmatpush1.msra.mxu0 0.0
    %569 = vmatprep.subr.mxu0 0.0
    %570 = vmatpush1.msra.mxu0 0.0
    %571 = vmatprep.subr.mxu0 0.0
    %572 = vmatpush1.msra.mxu0 0.0
    %573 = vmatprep.subr.mxu0 0.0
    %574 = vmatpush1.msra.mxu0 0.0
    %575 = vmatprep.subr.mxu0 0.0
    %576 = vmatpush1.msra.mxu0 0.0
    %577 = vmatprep.subr.mxu0 0.0
    %578 = vmatpush1.msra.mxu0 0.0
    %579 = vmatprep.subr.mxu0 0.0
    %580 = vmatpush1.msra.mxu0 0.0
    %581 = vmatprep.subr.mxu0 0.0
    %582 = vmatpush1.msra.mxu0 0.0
    %583 = vmatprep.subr.mxu0 0.0
    %584 = vmatpush1.msra.mxu0 0.0
    %585 = vmatprep.subr.mxu0 0.0
    %586 = vmatpush1.msra.mxu0 0.0
    %587 = vmatprep.subr.mxu0 0.0
    %588 = vmatpush1.msra.mxu0 0.0
    %589 = vmatprep.subr.mxu0 0.0
    %590 = vmatpush1.msra.mxu0 0.0
    %591 = vmatprep.subr.mxu0 0.0
    %592 = vmatpush1.msra.mxu0 0.0
    %593 = vmatprep.subr.mxu0 0.0
    %594 = vmatpush1.msra.mxu0 0.0
    %595 = vmatprep.subr.mxu0 0.0
    %596 = vmatpush1.msra.mxu0 0.0
    %597 = vmatprep.subr.mxu0 0.0
    %598 = vmatpush1.msra.mxu0 0.0
    %599 = vmatprep.subr.mxu0 0.0
    %600 = vmatpush1.msra.mxu0 0.0
    %601 = vmatprep.subr.mxu0 0.0
    %602 = vmatpush1.msra.mxu0 0.0
    %603 = vmatprep.subr.mxu0 0.0
    %604 = vmatpush1.msra.mxu0 0.0
    %605 = vmatprep.subr.mxu0 0.0
    %606 = vmatpush1.msra.mxu0 0.0
    %607 = vmatprep.subr.mxu0 0.0
    %608 = vmatpush1.msra.mxu0 0.0
    %609 = vmatprep.subr.mxu0 0.0
    %610 = vmatpush1.msra.mxu0 0.0
    %611 = vmatprep.mubr.f32.mxu0 0.0
    %612 = vmatmul.mubr.f32.gmra.mrb[0].mxu0 %v536
    %v613 = vpop.f32.mrb[0].mxu0
    %v614 = vadd.f32 %v532, %v613
    %v615 = vpop.f32.mrb[0].mxu0
    %616 = vmatprep.mubr.f32.mxu0 0.0
    %617 = vmatmul.mubr.f32.gmra.mrb[0].mxu0 %v539
    %v618 = vpop.f32.mrb[0].mxu0
    %v619 = vadd.f32 %v532, %v618
    %v620 = vpop.f32.mrb[0].mxu0
    %621 = vmatprep.mubr.f32.mxu0 0.0
    %622 = vmatmul.mubr.f32.gmra.mrb[0].mxu0 %v542
    %v623 = vpop.f32.mrb[0].mxu0
    %v624 = vadd.f32 %v532, %v623
    %v625 = vpop.f32.mrb[0].mxu0
    %626 = vmatprep.mubr.f32.mxu0 0.0
    %627 = vmatmul.mubr.f32.gmra.mrb[0].mxu0 %v545
    %v628 = vpop.f32.mrb[0].mxu0
    %v629 = vadd.f32 %v532, %v628
    %v630 = vpop.f32.mrb[0].mxu0
    %631 = vdwg.mxu0
    %v632 = vld [vmem:[%s3] sm:$0xff]
    %633 = vmatprep.subr.mxu0 0.0
    %634 = vmatpush1.msra.mxu0 %v632
    %635 = vmatprep.subr.mxu0 0.0
    %636 = vmatpush1.msra.mxu0 0.0
    %637 = vmatprep.subr.mxu0 0.0
    %638 = vmatpush1.msra.mxu0 0.0
    %639 = vmatprep.subr.mxu0 0.0
    %640 = vmatpush1.msra.mxu0 0.0
    %641 = vmatprep.subr.mxu0 0.0
    %642 = vmatpush1.msra.mxu0 0.0
    %643 = vmatprep.subr.mxu0 0.0
    %644 = vmatpush1.msra.mxu0 0.0
    %645 = vmatprep.subr.mxu0 0.0
    %646 = vmatpush1.msra.mxu0 0.0
    %647 = vmatprep.subr.mxu0 0.0
    %648 = vmatpush1.msra.mxu0 0.0
    %649 = vmatprep.subr.mxu0 0.0
    %650 = vmatpush1.msra.mxu0 0.0
    %651 = vmatprep.subr.mxu0 0.0
    %652 = vmatpush1.msra.mxu0 0.0
    %653 = vmatprep.subr.mxu0 0.0
    %654 = vmatpush1.msra.mxu0 0.0
    %655 = vmatprep.subr.mxu0 0.0
    %656 = vmatpush1.msra.mxu0 0.0
    %657 = vmatprep.subr.mxu0 0.0
    %658 = vmatpush1.msra.mxu0 0.0
    %659 = vmatprep.subr.mxu0 0.0
    %660 = vmatpush1.msra.mxu0 0.0
    %661 = vmatprep.subr.mxu0 0.0
    %662 = vmatpush1.msra.mxu0 0.0
    %663 = vmatprep.subr.mxu0 0.0
    %664 = vmatpush1.msra.mxu0 0.0
    %665 = vmatprep.subr.mxu0 0.0
    %666 = vmatpush1.msra.mxu0 0.0
    %667 = vmatprep.subr.mxu0 0.0
    %668 = vmatpush1.msra.mxu0 0.0
    %669 = vmatprep.subr.mxu0 0.0
    %670 = vmatpush1.msra.mxu0 0.0
    %671 = vmatprep.subr.mxu0 0.0
    %672 = vmatpush1.msra.mxu0 0.0
    %673 = vmatprep.subr.mxu0 0.0
    %674 = vmatpush1.msra.mxu0 0.0
    %675 = vmatprep.subr.mxu0 0.0
    %676 = vmatpush1.msra.mxu0 0.0
    %677 = vmatprep.subr.mxu0 0.0
    %678 = vmatpush1.msra.mxu0 0.0
    %679 = vmatprep.subr.mxu0 0.0
    %680 = vmatpush1.msra.mxu0 0.0
    %681 = vmatprep.subr.mxu0 0.0
    %682 = vmatpush1.msra.mxu0 0.0
    %683 = vmatprep.subr.mxu0 0.0
    %684 = vmatpush1.msra.mxu0 0.0
    %685 = vmatprep.subr.mxu0 0.0
    %686 = vmatpush1.msra.mxu0 0.0
    %687 = vmatprep.subr.mxu0 0.0
    %688 = vmatpush1.msra.mxu0 0.0
    %689 = vmatprep.subr.mxu0 0.0
    %690 = vmatpush1.msra.mxu0 0.0
    %691 = vmatprep.subr.mxu0 0.0
    %692 = vmatpush1.msra.mxu0 0.0
    %693 = vmatprep.subr.mxu0 0.0
    %694 = vmatpush1.msra.mxu0 0.0
    %695 = vmatprep.subr.mxu0 0.0
    %696 = vmatpush1.msra.mxu0 0.0
    %697 = vmatprep.mubr.f32.mxu0 0.0
    %698 = vmatmul.mubr.f32.gmra.mrb[0].mxu0 %v536
    %v699 = vpop.f32.mrb[0].mxu0
    %v700 = vadd.f32 0.0, %v699
    %v701 = vpop.f32.mrb[0].mxu0
    %702 = vmatprep.mubr.f32.mxu0 0.0
    %703 = vmatmul.mubr.f32.gmra.mrb[0].mxu0 %v539
    %v704 = vpop.f32.mrb[0].mxu0
    %v705 = vadd.f32 0.0, %v704
    %v706 = vpop.f32.mrb[0].mxu0
    %707 = vmatprep.mubr.f32.mxu0 0.0
    %708 = vmatmul.mubr.f32.gmra.mrb[0].mxu0 %v542
    %v709 = vpop.f32.mrb[0].mxu0
    %v710 = vadd.f32 0.0, %v709
    %v711 = vpop.f32.mrb[0].mxu0
    %712 = vmatprep.mubr.f32.mxu0 0.0
    %713 = vmatmul.mubr.f32.gmra.mrb[0].mxu0 %v545
    %v714 = vpop.f32.mrb[0].mxu0
    %v715 = vadd.f32 0.0, %v714
    %v716 = vpop.f32.mrb[0].mxu0
    %717 = vdwg.mxu0
    %v718 = vrot.slane %v700, 6
    %v719 = vrot.slane %v705, 6
    %v720 = vrot.slane %v710, 6
    %v721 = vrot.slane %v715, 6
    %v722 = vsel %vm389, %v720, %v721
    %v723 = vsel %vm389, %v719, %v720
    %v724 = vsel %vm389, %v718, %v719
    %v725 = vsel %vm389, %v721, %v718
    %v726 = vsel %vm398, %v725, 0.0
    %v727 = vsel %vm399, %v724, 0.0
    %v728 = vsel %vm398, %v723, 0.0
    %v729 = vsel %vm399, %v722, 0.0
    %v730 = vadd.f32 %v614, %v726
    %v731 = vadd.f32 %v619, %v727
    %v732 = vadd.f32 %v624, %v728
    %v733 = vadd.f32 %v629, %v729
    %s734 = scalar_lea.vmem %s3, 8
    %v735 = vld [vmem:[%s734] sm:$0xff]
    %736 = vmatprep.subr.mxu0 0.0
    %737 = vmatpush1.msra.mxu0 %v735
    %738 = vmatprep.subr.mxu0 0.0
    %739 = vmatpush1.msra.mxu0 0.0
    %740 = vmatprep.subr.mxu0 0.0
    %741 = vmatpush1.msra.mxu0 0.0
    %742 = vmatprep.subr.mxu0 0.0
    %743 = vmatpush1.msra.mxu0 0.0
    %744 = vmatprep.subr.mxu0 0.0
    %745 = vmatpush1.msra.mxu0 0.0
    %746 = vmatprep.subr.mxu0 0.0
    %747 = vmatpush1.msra.mxu0 0.0
    %748 = vmatprep.subr.mxu0 0.0
    %749 = vmatpush1.msra.mxu0 0.0
    %750 = vmatprep.subr.mxu0 0.0
    %751 = vmatpush1.msra.mxu0 0.0
    %752 = vmatprep.subr.mxu0 0.0
    %753 = vmatpush1.msra.mxu0 0.0
    %754 = vmatprep.subr.mxu0 0.0
    %755 = vmatpush1.msra.mxu0 0.0
    %756 = vmatprep.subr.mxu0 0.0
    %757 = vmatpush1.msra.mxu0 0.0
    %758 = vmatprep.subr.mxu0 0.0
    %759 = vmatpush1.msra.mxu0 0.0
    %760 = vmatprep.subr.mxu0 0.0
    %761 = vmatpush1.msra.mxu0 0.0
    %762 = vmatprep.subr.mxu0 0.0
    %763 = vmatpush1.msra.mxu0 0.0
    %764 = vmatprep.subr.mxu0 0.0
    %765 = vmatpush1.msra.mxu0 0.0
    %766 = vmatprep.subr.mxu0 0.0
    %767 = vmatpush1.msra.mxu0 0.0
    %768 = vmatprep.subr.mxu0 0.0
    %769 = vmatpush1.msra.mxu0 0.0
    %770 = vmatprep.subr.mxu0 0.0
    %771 = vmatpush1.msra.mxu0 0.0
    %772 = vmatprep.subr.mxu0 0.0
    %773 = vmatpush1.msra.mxu0 0.0
    %774 = vmatprep.subr.mxu0 0.0
    %775 = vmatpush1.msra.mxu0 0.0
    %776 = vmatprep.subr.mxu0 0.0
    %777 = vmatpush1.msra.mxu0 0.0
    %778 = vmatprep.subr.mxu0 0.0
    %779 = vmatpush1.msra.mxu0 0.0
    %780 = vmatprep.subr.mxu0 0.0
    %781 = vmatpush1.msra.mxu0 0.0
    %782 = vmatprep.subr.mxu0 0.0
    %783 = vmatpush1.msra.mxu0 0.0
    %784 = vmatprep.subr.mxu0 0.0
    %785 = vmatpush1.msra.mxu0 0.0
    %786 = vmatprep.subr.mxu0 0.0
    %787 = vmatpush1.msra.mxu0 0.0
    %788 = vmatprep.subr.mxu0 0.0
    %789 = vmatpush1.msra.mxu0 0.0
    %790 = vmatprep.subr.mxu0 0.0
    %791 = vmatpush1.msra.mxu0 0.0
    %792 = vmatprep.subr.mxu0 0.0
    %793 = vmatpush1.msra.mxu0 0.0
    %794 = vmatprep.subr.mxu0 0.0
    %795 = vmatpush1.msra.mxu0 0.0
    %796 = vmatprep.subr.mxu0 0.0
    %797 = vmatpush1.msra.mxu0 0.0
    %798 = vmatprep.subr.mxu0 0.0
    %799 = vmatpush1.msra.mxu0 0.0
    %800 = vmatprep.mubr.f32.mxu0 0.0
    %801 = vmatmul.mubr.f32.gmra.mrb[0].mxu0 %v536
    %v802 = vpop.f32.mrb[0].mxu0
    %v803 = vadd.f32 0.0, %v802
    %v804 = vpop.f32.mrb[0].mxu0
    %805 = vmatprep.mubr.f32.mxu0 0.0
    %806 = vmatmul.mubr.f32.gmra.mrb[0].mxu0 %v539
    %v807 = vpop.f32.mrb[0].mxu0
    %v808 = vadd.f32 0.0, %v807
    %v809 = vpop.f32.mrb[0].mxu0
    %810 = vmatprep.mubr.f32.mxu0 0.0
    %811 = vmatmul.mubr.f32.gmra.mrb[0].mxu0 %v542
    %v812 = vpop.f32.mrb[0].mxu0
    %v813 = vadd.f32 0.0, %v812
    %v814 = vpop.f32.mrb[0].mxu0
    %815 = vmatprep.mubr.f32.mxu0 0.0
    %816 = vmatmul.mubr.f32.gmra.mrb[0].mxu0 %v545
    %v817 = vpop.f32.mrb[0].mxu0
    %v818 = vadd.f32 0.0, %v817
    %v819 = vpop.f32.mrb[0].mxu0
    %820 = vdwg.mxu0
    %v821 = vrot.slane %v803, 7
    %v822 = vrot.slane %v808, 7
    %v823 = vrot.slane %v813, 7
    %v824 = vrot.slane %v818, 7
    %v825 = vsel %vm502, %v823, %v824
    %v826 = vsel %vm502, %v822, %v823
    %v827 = vsel %vm502, %v821, %v822
    %v828 = vsel %vm502, %v824, %v821
    %v829 = vsel %vm511, %v828, 0.0
    %v830 = vsel %vm512, %v827, 0.0
    %v831 = vsel %vm511, %v826, 0.0
    %v832 = vsel %vm512, %v825, 0.0
    %v833 = vadd.f32 %v730, %v829
    %v834 = vadd.f32 %v731, %v830
    %v835 = vadd.f32 %v732, %v831
    %v836 = vadd.f32 %v733, %v832
    %v837 = vmax.f32 %v833, 0.0
    %v838 = vmax.f32 %v834, 0.0
    %v839 = vmax.f32 %v835, 0.0
    %v840 = vmax.f32 %v836, 0.0
    %v841 = vadd.f32 %v837, %v181
    %v842 = vadd.f32 %v838, %v186
    %v843 = vadd.f32 %v839, %v191
    %v844 = vadd.f32 %v840, %v196
    %v845 = vmax.f32 %v841, 0.0
    %v846 = vmax.f32 %v842, 0.0
    %v847 = vmax.f32 %v843, 0.0
    %v848 = vmax.f32 %v844, 0.0
    %s849 = scalar_lea.vmem %s7, 16
    %v850 = vld [vmem:[%s849] sm:$0xff]
    %v851 = vld [vmem:[%s8] sm:$0x1]
    %v853 = vlaneseq
    %v854 = vshrl.u32 %v853, 7
    %v855 = vsub.s32 0, %v854
    %v856 = vrot.slane %v851, %v855
    %v859 = vsel %vm534, %v845, 0
    %v862 = vsel %vm534, %v846, 0
    %v865 = vsel %vm534, %v847, 0
    %v868 = vsel %vm534, %v848, 0
    %870 = vmatprep.subr.mxu0 0.0
    %871 = vmatpush1.msra.mxu0 %v850
    %872 = vmatprep.subr.mxu0 0.0
    %873 = vmatpush1.msra.mxu0 0.0
    %874 = vmatprep.subr.mxu0 0.0
    %875 = vmatpush1.msra.mxu0 0.0
    %876 = vmatprep.subr.mxu0 0.0
    %877 = vmatpush1.msra.mxu0 0.0
    %878 = vmatprep.subr.mxu0 0.0
    %879 = vmatpush1.msra.mxu0 0.0
    %880 = vmatprep.subr.mxu0 0.0
    %881 = vmatpush1.msra.mxu0 0.0
    %882 = vmatprep.subr.mxu0 0.0
    %883 = vmatpush1.msra.mxu0 0.0
    %884 = vmatprep.subr.mxu0 0.0
    %885 = vmatpush1.msra.mxu0 0.0
    %886 = vmatprep.subr.mxu0 0.0
    %887 = vmatpush1.msra.mxu0 0.0
    %888 = vmatprep.subr.mxu0 0.0
    %889 = vmatpush1.msra.mxu0 0.0
    %890 = vmatprep.subr.mxu0 0.0
    %891 = vmatpush1.msra.mxu0 0.0
    %892 = vmatprep.subr.mxu0 0.0
    %893 = vmatpush1.msra.mxu0 0.0
    %894 = vmatprep.subr.mxu0 0.0
    %895 = vmatpush1.msra.mxu0 0.0
    %896 = vmatprep.subr.mxu0 0.0
    %897 = vmatpush1.msra.mxu0 0.0
    %898 = vmatprep.subr.mxu0 0.0
    %899 = vmatpush1.msra.mxu0 0.0
    %900 = vmatprep.subr.mxu0 0.0
    %901 = vmatpush1.msra.mxu0 0.0
    %902 = vmatprep.subr.mxu0 0.0
    %903 = vmatpush1.msra.mxu0 0.0
    %904 = vmatprep.subr.mxu0 0.0
    %905 = vmatpush1.msra.mxu0 0.0
    %906 = vmatprep.subr.mxu0 0.0
    %907 = vmatpush1.msra.mxu0 0.0
    %908 = vmatprep.subr.mxu0 0.0
    %909 = vmatpush1.msra.mxu0 0.0
    %910 = vmatprep.subr.mxu0 0.0
    %911 = vmatpush1.msra.mxu0 0.0
    %912 = vmatprep.subr.mxu0 0.0
    %913 = vmatpush1.msra.mxu0 0.0
    %914 = vmatprep.subr.mxu0 0.0
    %915 = vmatpush1.msra.mxu0 0.0
    %916 = vmatprep.subr.mxu0 0.0
    %917 = vmatpush1.msra.mxu0 0.0
    %918 = vmatprep.subr.mxu0 0.0
    %919 = vmatpush1.msra.mxu0 0.0
    %920 = vmatprep.subr.mxu0 0.0
    %921 = vmatpush1.msra.mxu0 0.0
    %922 = vmatprep.subr.mxu0 0.0
    %923 = vmatpush1.msra.mxu0 0.0
    %924 = vmatprep.subr.mxu0 0.0
    %925 = vmatpush1.msra.mxu0 0.0
    %926 = vmatprep.subr.mxu0 0.0
    %927 = vmatpush1.msra.mxu0 0.0
    %928 = vmatprep.subr.mxu0 0.0
    %929 = vmatpush1.msra.mxu0 0.0
    %930 = vmatprep.subr.mxu0 0.0
    %931 = vmatpush1.msra.mxu0 0.0
    %932 = vmatprep.subr.mxu0 0.0
    %933 = vmatpush1.msra.mxu0 0.0
    %934 = vmatprep.mubr.f32.mxu0 0.0
    %935 = vmatmul.mubr.f32.gmra.mrb[0].mxu0 %v859
    %v936 = vpop.f32.mrb[0].mxu0
    %v937 = vadd.f32 %v856, %v936
    %v938 = vpop.f32.mrb[0].mxu0
    %939 = vmatprep.mubr.f32.mxu0 0.0
    %940 = vmatmul.mubr.f32.gmra.mrb[0].mxu0 %v862
    %v941 = vpop.f32.mrb[0].mxu0
    %v942 = vadd.f32 %v856, %v941
    %v943 = vpop.f32.mrb[0].mxu0
    %944 = vmatprep.mubr.f32.mxu0 0.0
    %945 = vmatmul.mubr.f32.gmra.mrb[0].mxu0 %v865
    %v946 = vpop.f32.mrb[0].mxu0
    %v947 = vadd.f32 %v856, %v946
    %v948 = vpop.f32.mrb[0].mxu0
    %949 = vmatprep.mubr.f32.mxu0 0.0
    %950 = vmatmul.mubr.f32.gmra.mrb[0].mxu0 %v868
    %v951 = vpop.f32.mrb[0].mxu0
    %v952 = vadd.f32 %v856, %v951
    %v953 = vpop.f32.mrb[0].mxu0
    %954 = vdwg.mxu0
    %v955 = vld [vmem:[%s7] sm:$0xff]
    %956 = vmatprep.subr.mxu0 0.0
    %957 = vmatpush1.msra.mxu0 %v955
    %958 = vmatprep.subr.mxu0 0.0
    %959 = vmatpush1.msra.mxu0 0.0
    %960 = vmatprep.subr.mxu0 0.0
    %961 = vmatpush1.msra.mxu0 0.0
    %962 = vmatprep.subr.mxu0 0.0
    %963 = vmatpush1.msra.mxu0 0.0
    %964 = vmatprep.subr.mxu0 0.0
    %965 = vmatpush1.msra.mxu0 0.0
    %966 = vmatprep.subr.mxu0 0.0
    %967 = vmatpush1.msra.mxu0 0.0
    %968 = vmatprep.subr.mxu0 0.0
    %969 = vmatpush1.msra.mxu0 0.0
    %970 = vmatprep.subr.mxu0 0.0
    %971 = vmatpush1.msra.mxu0 0.0
    %972 = vmatprep.subr.mxu0 0.0
    %973 = vmatpush1.msra.mxu0 0.0
    %974 = vmatprep.subr.mxu0 0.0
    %975 = vmatpush1.msra.mxu0 0.0
    %976 = vmatprep.subr.mxu0 0.0
    %977 = vmatpush1.msra.mxu0 0.0
    %978 = vmatprep.subr.mxu0 0.0
    %979 = vmatpush1.msra.mxu0 0.0
    %980 = vmatprep.subr.mxu0 0.0
    %981 = vmatpush1.msra.mxu0 0.0
    %982 = vmatprep.subr.mxu0 0.0
    %983 = vmatpush1.msra.mxu0 0.0
    %984 = vmatprep.subr.mxu0 0.0
    %985 = vmatpush1.msra.mxu0 0.0
    %986 = vmatprep.subr.mxu0 0.0
    %987 = vmatpush1.msra.mxu0 0.0
    %988 = vmatprep.subr.mxu0 0.0
    %989 = vmatpush1.msra.mxu0 0.0
    %990 = vmatprep.subr.mxu0 0.0
    %991 = vmatpush1.msra.mxu0 0.0
    %992 = vmatprep.subr.mxu0 0.0
    %993 = vmatpush1.msra.mxu0 0.0
    %994 = vmatprep.subr.mxu0 0.0
    %995 = vmatpush1.msra.mxu0 0.0
    %996 = vmatprep.subr.mxu0 0.0
    %997 = vmatpush1.msra.mxu0 0.0
    %998 = vmatprep.subr.mxu0 0.0
    %999 = vmatpush1.msra.mxu0 0.0
    %1000 = vmatprep.subr.mxu0 0.0
    %1001 = vmatpush1.msra.mxu0 0.0
    %1002 = vmatprep.subr.mxu0 0.0
    %1003 = vmatpush1.msra.mxu0 0.0
    %1004 = vmatprep.subr.mxu0 0.0
    %1005 = vmatpush1.msra.mxu0 0.0
    %1006 = vmatprep.subr.mxu0 0.0
    %1007 = vmatpush1.msra.mxu0 0.0
    %1008 = vmatprep.subr.mxu0 0.0
    %1009 = vmatpush1.msra.mxu0 0.0
    %1010 = vmatprep.subr.mxu0 0.0
    %1011 = vmatpush1.msra.mxu0 0.0
    %1012 = vmatprep.subr.mxu0 0.0
    %1013 = vmatpush1.msra.mxu0 0.0
    %1014 = vmatprep.subr.mxu0 0.0
    %1015 = vmatpush1.msra.mxu0 0.0
    %1016 = vmatprep.subr.mxu0 0.0
    %1017 = vmatpush1.msra.mxu0 0.0
    %1018 = vmatprep.subr.mxu0 0.0
    %1019 = vmatpush1.msra.mxu0 0.0
    %1020 = vmatprep.mubr.f32.mxu0 0.0
    %1021 = vmatmul.mubr.f32.gmra.mrb[0].mxu0 %v859
    %v1022 = vpop.f32.mrb[0].mxu0
    %v1023 = vadd.f32 0.0, %v1022
    %v1024 = vpop.f32.mrb[0].mxu0
    %1025 = vmatprep.mubr.f32.mxu0 0.0
    %1026 = vmatmul.mubr.f32.gmra.mrb[0].mxu0 %v862
    %v1027 = vpop.f32.mrb[0].mxu0
    %v1028 = vadd.f32 0.0, %v1027
    %v1029 = vpop.f32.mrb[0].mxu0
    %1030 = vmatprep.mubr.f32.mxu0 0.0
    %1031 = vmatmul.mubr.f32.gmra.mrb[0].mxu0 %v865
    %v1032 = vpop.f32.mrb[0].mxu0
    %v1033 = vadd.f32 0.0, %v1032
    %v1034 = vpop.f32.mrb[0].mxu0
    %1035 = vmatprep.mubr.f32.mxu0 0.0
    %1036 = vmatmul.mubr.f32.gmra.mrb[0].mxu0 %v868
    %v1037 = vpop.f32.mrb[0].mxu0
    %v1038 = vadd.f32 0.0, %v1037
    %v1039 = vpop.f32.mrb[0].mxu0
    %1040 = vdwg.mxu0
    %v1041 = vrot.slane %v1023, 4
    %v1042 = vrot.slane %v1028, 4
    %v1043 = vrot.slane %v1033, 4
    %v1044 = vrot.slane %v1038, 4
    %vm1045 = vcmp.lt.s32.totalorder %v83, 4
    %v1046 = vsel %vm1045, %v1043, %v1044
    %v1047 = vsel %vm1045, %v1042, %v1043
    %v1048 = vsel %vm1045, %v1041, %v1042
    %v1049 = vsel %vm1045, %v1044, %v1041
    %vm1050 = vcmp.ge.s32.totalorder %v83, 4
    %vm1051 = vcmp.ge.s32.totalorder %v84, 4
    %v1052 = vsel %vm1050, 1, 0
    %v1053 = vsel %vm1051, 1, 0
    %vm1054 = vcmp.eq.s32.totalorder %v1052, 1
    %vm1055 = vcmp.eq.s32.totalorder %v1053, 1
    %v1056 = vsel %vm1054, %v1049, 0.0
    %v1057 = vsel %vm1055, %v1048, 0.0
    %v1058 = vsel %vm1054, %v1047, 0.0
    %v1059 = vsel %vm1055, %v1046, 0.0
    %v1060 = vadd.f32 %v937, %v1056
    %v1061 = vadd.f32 %v942, %v1057
    %v1062 = vadd.f32 %v947, %v1058
    %v1063 = vadd.f32 %v952, %v1059
    %s1064 = scalar_lea.vmem %s7, 8
    %v1065 = vld [vmem:[%s1064] sm:$0xff]
    %1066 = vmatprep.subr.mxu0 0.0
    %1067 = vmatpush1.msra.mxu0 %v1065
    %1068 = vmatprep.subr.mxu0 0.0
    %1069 = vmatpush1.msra.mxu0 0.0
    %1070 = vmatprep.subr.mxu0 0.0
    %1071 = vmatpush1.msra.mxu0 0.0
    %1072 = vmatprep.subr.mxu0 0.0
    %1073 = vmatpush1.msra.mxu0 0.0
    %1074 = vmatprep.subr.mxu0 0.0
    %1075 = vmatpush1.msra.mxu0 0.0
    %1076 = vmatprep.subr.mxu0 0.0
    %1077 = vmatpush1.msra.mxu0 0.0
    %1078 = vmatprep.subr.mxu0 0.0
    %1079 = vmatpush1.msra.mxu0 0.0
    %1080 = vmatprep.subr.mxu0 0.0
    %1081 = vmatpush1.msra.mxu0 0.0
    %1082 = vmatprep.subr.mxu0 0.0
    %1083 = vmatpush1.msra.mxu0 0.0
    %1084 = vmatprep.subr.mxu0 0.0
    %1085 = vmatpush1.msra.mxu0 0.0
    %1086 = vmatprep.subr.mxu0 0.0
    %1087 = vmatpush1.msra.mxu0 0.0
    %1088 = vmatprep.subr.mxu0 0.0
    %1089 = vmatpush1.msra.mxu0 0.0
    %1090 = vmatprep.subr.mxu0 0.0
    %1091 = vmatpush1.msra.mxu0 0.0
    %1092 = vmatprep.subr.mxu0 0.0
    %1093 = vmatpush1.msra.mxu0 0.0
    %1094 = vmatprep.subr.mxu0 0.0
    %1095 = vmatpush1.msra.mxu0 0.0
    %1096 = vmatprep.subr.mxu0 0.0
    %1097 = vmatpush1.msra.mxu0 0.0
    %1098 = vmatprep.subr.mxu0 0.0
    %1099 = vmatpush1.msra.mxu0 0.0
    %1100 = vmatprep.subr.mxu0 0.0
    %1101 = vmatpush1.msra.mxu0 0.0
    %1102 = vmatprep.subr.mxu0 0.0
    %1103 = vmatpush1.msra.mxu0 0.0
    %1104 = vmatprep.subr.mxu0 0.0
    %1105 = vmatpush1.msra.mxu0 0.0
    %1106 = vmatprep.subr.mxu0 0.0
    %1107 = vmatpush1.msra.mxu0 0.0
    %1108 = vmatprep.subr.mxu0 0.0
    %1109 = vmatpush1.msra.mxu0 0.0
    %1110 = vmatprep.subr.mxu0 0.0
    %1111 = vmatpush1.msra.mxu0 0.0
    %1112 = vmatprep.subr.mxu0 0.0
    %1113 = vmatpush1.msra.mxu0 0.0
    %1114 = vmatprep.subr.mxu0 0.0
    %1115 = vmatpush1.msra.mxu0 0.0
    %1116 = vmatprep.subr.mxu0 0.0
    %1117 = vmatpush1.msra.mxu0 0.0
    %1118 = vmatprep.subr.mxu0 0.0
    %1119 = vmatpush1.msra.mxu0 0.0
    %1120 = vmatprep.subr.mxu0 0.0
    %1121 = vmatpush1.msra.mxu0 0.0
    %1122 = vmatprep.subr.mxu0 0.0
    %1123 = vmatpush1.msra.mxu0 0.0
    %1124 = vmatprep.subr.mxu0 0.0
    %1125 = vmatpush1.msra.mxu0 0.0
    %1126 = vmatprep.subr.mxu0 0.0
    %1127 = vmatpush1.msra.mxu0 0.0
    %1128 = vmatprep.subr.mxu0 0.0
    %1129 = vmatpush1.msra.mxu0 0.0
    %1130 = vmatprep.mubr.f32.mxu0 0.0
    %1131 = vmatmul.mubr.f32.gmra.mrb[0].mxu0 %v859
    %v1132 = vpop.f32.mrb[0].mxu0
    %v1133 = vadd.f32 0.0, %v1132
    %v1134 = vpop.f32.mrb[0].mxu0
    %1135 = vmatprep.mubr.f32.mxu0 0.0
    %1136 = vmatmul.mubr.f32.gmra.mrb[0].mxu0 %v862
    %v1137 = vpop.f32.mrb[0].mxu0
    %v1138 = vadd.f32 0.0, %v1137
    %v1139 = vpop.f32.mrb[0].mxu0
    %1140 = vmatprep.mubr.f32.mxu0 0.0
    %1141 = vmatmul.mubr.f32.gmra.mrb[0].mxu0 %v865
    %v1142 = vpop.f32.mrb[0].mxu0
    %v1143 = vadd.f32 0.0, %v1142
    %v1144 = vpop.f32.mrb[0].mxu0
    %1145 = vmatprep.mubr.f32.mxu0 0.0
    %1146 = vmatmul.mubr.f32.gmra.mrb[0].mxu0 %v868
    %v1147 = vpop.f32.mrb[0].mxu0
    %v1148 = vadd.f32 0.0, %v1147
    %v1149 = vpop.f32.mrb[0].mxu0
    %1150 = vdwg.mxu0
    %v1151 = vrot.slane %v1133, 6
    %v1152 = vrot.slane %v1138, 6
    %v1153 = vrot.slane %v1143, 6
    %v1154 = vrot.slane %v1148, 6
    %v1155 = vsel %vm389, %v1153, %v1154
    %v1156 = vsel %vm389, %v1152, %v1153
    %v1157 = vsel %vm389, %v1151, %v1152
    %v1158 = vsel %vm389, %v1154, %v1151
    %v1159 = vsel %vm398, %v1158, 0.0
    %v1160 = vsel %vm399, %v1157, 0.0
    %v1161 = vsel %vm398, %v1156, 0.0
    %v1162 = vsel %vm399, %v1155, 0.0
    %v1163 = vadd.f32 %v1060, %v1159
    %v1164 = vadd.f32 %v1061, %v1160
    %v1165 = vadd.f32 %v1062, %v1161
    %v1166 = vadd.f32 %v1063, %v1162
    %v1167 = vmax.f32 %v1163, 0.0
    %v1168 = vmax.f32 %v1164, 0.0
    %v1169 = vmax.f32 %v1165, 0.0
    %v1170 = vmax.f32 %v1166, 0.0
    %s1171 = scalar_lea.vmem %s9, 16
    %v1172 = vld [vmem:[%s1171] sm:$0xff]
    %v1173 = vld [vmem:[%s10] sm:$0x1]
    %v1175 = vlaneseq
    %v1176 = vshrl.u32 %v1175, 7
    %v1177 = vsub.s32 0, %v1176
    %v1178 = vrot.slane %v1173, %v1177
    %v1181 = vsel %vm534, %v1167, 0
    %v1184 = vsel %vm534, %v1168, 0
    %v1187 = vsel %vm534, %v1169, 0
    %v1190 = vsel %vm534, %v1170, 0
    %1192 = vmatprep.subr.mxu0 0.0
    %1193 = vmatpush1.msra.mxu0 %v1172
    %1194 = vmatprep.subr.mxu0 0.0
    %1195 = vmatpush1.msra.mxu0 0.0
    %1196 = vmatprep.subr.mxu0 0.0
    %1197 = vmatpush1.msra.mxu0 0.0
    %1198 = vmatprep.subr.mxu0 0.0
    %1199 = vmatpush1.msra.mxu0 0.0
    %1200 = vmatprep.subr.mxu0 0.0
    %1201 = vmatpush1.msra.mxu0 0.0
    %1202 = vmatprep.subr.mxu0 0.0
    %1203 = vmatpush1.msra.mxu0 0.0
    %1204 = vmatprep.subr.mxu0 0.0
    %1205 = vmatpush1.msra.mxu0 0.0
    %1206 = vmatprep.subr.mxu0 0.0
    %1207 = vmatpush1.msra.mxu0 0.0
    %1208 = vmatprep.subr.mxu0 0.0
    %1209 = vmatpush1.msra.mxu0 0.0
    %1210 = vmatprep.subr.mxu0 0.0
    %1211 = vmatpush1.msra.mxu0 0.0
    %1212 = vmatprep.subr.mxu0 0.0
    %1213 = vmatpush1.msra.mxu0 0.0
    %1214 = vmatprep.subr.mxu0 0.0
    %1215 = vmatpush1.msra.mxu0 0.0
    %1216 = vmatprep.subr.mxu0 0.0
    %1217 = vmatpush1.msra.mxu0 0.0
    %1218 = vmatprep.subr.mxu0 0.0
    %1219 = vmatpush1.msra.mxu0 0.0
    %1220 = vmatprep.subr.mxu0 0.0
    %1221 = vmatpush1.msra.mxu0 0.0
    %1222 = vmatprep.subr.mxu0 0.0
    %1223 = vmatpush1.msra.mxu0 0.0
    %1224 = vmatprep.subr.mxu0 0.0
    %1225 = vmatpush1.msra.mxu0 0.0
    %1226 = vmatprep.subr.mxu0 0.0
    %1227 = vmatpush1.msra.mxu0 0.0
    %1228 = vmatprep.subr.mxu0 0.0
    %1229 = vmatpush1.msra.mxu0 0.0
    %1230 = vmatprep.subr.mxu0 0.0
    %1231 = vmatpush1.msra.mxu0 0.0
    %1232 = vmatprep.subr.mxu0 0.0
    %1233 = vmatpush1.msra.mxu0 0.0
    %1234 = vmatprep.subr.mxu0 0.0
    %1235 = vmatpush1.msra.mxu0 0.0
    %1236 = vmatprep.subr.mxu0 0.0
    %1237 = vmatpush1.msra.mxu0 0.0
    %1238 = vmatprep.subr.mxu0 0.0
    %1239 = vmatpush1.msra.mxu0 0.0
    %1240 = vmatprep.subr.mxu0 0.0
    %1241 = vmatpush1.msra.mxu0 0.0
    %1242 = vmatprep.subr.mxu0 0.0
    %1243 = vmatpush1.msra.mxu0 0.0
    %1244 = vmatprep.subr.mxu0 0.0
    %1245 = vmatpush1.msra.mxu0 0.0
    %1246 = vmatprep.subr.mxu0 0.0
    %1247 = vmatpush1.msra.mxu0 0.0
    %1248 = vmatprep.subr.mxu0 0.0
    %1249 = vmatpush1.msra.mxu0 0.0
    %1250 = vmatprep.subr.mxu0 0.0
    %1251 = vmatpush1.msra.mxu0 0.0
    %1252 = vmatprep.subr.mxu0 0.0
    %1253 = vmatpush1.msra.mxu0 0.0
    %1254 = vmatprep.subr.mxu0 0.0
    %1255 = vmatpush1.msra.mxu0 0.0
    %1256 = vmatprep.mubr.f32.mxu0 0.0
    %1257 = vmatmul.mubr.f32.gmra.mrb[0].mxu0 %v1181
    %v1258 = vpop.f32.mrb[0].mxu0
    %v1259 = vpop.f32.mrb[0].mxu0
    %1260 = vmatprep.mubr.f32.mxu0 0.0
    %1261 = vmatmul.mubr.f32.gmra.mrb[0].mxu0 %v1184
    %v1262 = vpop.f32.mrb[0].mxu0
    %v1263 = vadd.f32 %v1178, %v1262
    %v1264 = vpop.f32.mrb[0].mxu0
    %1265 = vmatprep.mubr.f32.mxu0 0.0
    %1266 = vmatmul.mubr.f32.gmra.mrb[0].mxu0 %v1187
    %v1267 = vpop.f32.mrb[0].mxu0
    %v1268 = vpop.f32.mrb[0].mxu0
    %1269 = vmatprep.mubr.f32.mxu0 0.0
    %1270 = vmatmul.mubr.f32.gmra.mrb[0].mxu0 %v1190
    %v1271 = vpop.f32.mrb[0].mxu0
    %v1272 = vadd.f32 %v1178, %v1271
    %v1273 = vpop.f32.mrb[0].mxu0
    %1274 = vdwg.mxu0
    %v1275 = vld [vmem:[%s9] sm:$0xff]
    %1276 = vmatprep.subr.mxu0 0.0
    %1277 = vmatpush1.msra.mxu0 %v1275
    %1278 = vmatprep.subr.mxu0 0.0
    %1279 = vmatpush1.msra.mxu0 0.0
    %1280 = vmatprep.subr.mxu0 0.0
    %1281 = vmatpush1.msra.mxu0 0.0
    %1282 = vmatprep.subr.mxu0 0.0
    %1283 = vmatpush1.msra.mxu0 0.0
    %1284 = vmatprep.subr.mxu0 0.0
    %1285 = vmatpush1.msra.mxu0 0.0
    %1286 = vmatprep.subr.mxu0 0.0
    %1287 = vmatpush1.msra.mxu0 0.0
    %1288 = vmatprep.subr.mxu0 0.0
    %1289 = vmatpush1.msra.mxu0 0.0
    %1290 = vmatprep.subr.mxu0 0.0
    %1291 = vmatpush1.msra.mxu0 0.0
    %1292 = vmatprep.subr.mxu0 0.0
    %1293 = vmatpush1.msra.mxu0 0.0
    %1294 = vmatprep.subr.mxu0 0.0
    %1295 = vmatpush1.msra.mxu0 0.0
    %1296 = vmatprep.subr.mxu0 0.0
    %1297 = vmatpush1.msra.mxu0 0.0
    %1298 = vmatprep.subr.mxu0 0.0
    %1299 = vmatpush1.msra.mxu0 0.0
    %1300 = vmatprep.subr.mxu0 0.0
    %1301 = vmatpush1.msra.mxu0 0.0
    %1302 = vmatprep.subr.mxu0 0.0
    %1303 = vmatpush1.msra.mxu0 0.0
    %1304 = vmatprep.subr.mxu0 0.0
    %1305 = vmatpush1.msra.mxu0 0.0
    %1306 = vmatprep.subr.mxu0 0.0
    %1307 = vmatpush1.msra.mxu0 0.0
    %1308 = vmatprep.subr.mxu0 0.0
    %1309 = vmatpush1.msra.mxu0 0.0
    %1310 = vmatprep.subr.mxu0 0.0
    %1311 = vmatpush1.msra.mxu0 0.0
    %1312 = vmatprep.subr.mxu0 0.0
    %1313 = vmatpush1.msra.mxu0 0.0
    %1314 = vmatprep.subr.mxu0 0.0
    %1315 = vmatpush1.msra.mxu0 0.0
    %1316 = vmatprep.subr.mxu0 0.0
    %1317 = vmatpush1.msra.mxu0 0.0
    %1318 = vmatprep.subr.mxu0 0.0
    %1319 = vmatpush1.msra.mxu0 0.0
    %1320 = vmatprep.subr.mxu0 0.0
    %1321 = vmatpush1.msra.mxu0 0.0
    %1322 = vmatprep.subr.mxu0 0.0
    %1323 = vmatpush1.msra.mxu0 0.0
    %1324 = vmatprep.subr.mxu0 0.0
    %1325 = vmatpush1.msra.mxu0 0.0
    %1326 = vmatprep.subr.mxu0 0.0
    %1327 = vmatpush1.msra.mxu0 0.0
    %1328 = vmatprep.subr.mxu0 0.0
    %1329 = vmatpush1.msra.mxu0 0.0
    %1330 = vmatprep.subr.mxu0 0.0
    %1331 = vmatpush1.msra.mxu0 0.0
    %1332 = vmatprep.subr.mxu0 0.0
    %1333 = vmatpush1.msra.mxu0 0.0
    %1334 = vmatprep.subr.mxu0 0.0
    %1335 = vmatpush1.msra.mxu0 0.0
    %1336 = vmatprep.subr.mxu0 0.0
    %1337 = vmatpush1.msra.mxu0 0.0
    %1338 = vmatprep.subr.mxu0 0.0
    %1339 = vmatpush1.msra.mxu0 0.0
    %1340 = vmatprep.mubr.f32.mxu0 0.0
    %1341 = vmatmul.mubr.f32.gmra.mrb[0].mxu0 %v1181
    %v1342 = vpop.f32.mrb[0].mxu0
    %v1343 = vadd.f32 0.0, %v1342
    %v1344 = vpop.f32.mrb[0].mxu0
    %1345 = vmatprep.mubr.f32.mxu0 0.0
    %1346 = vmatmul.mubr.f32.gmra.mrb[0].mxu0 %v1184
    %v1347 = vpop.f32.mrb[0].mxu0
    %v1348 = vadd.f32 0.0, %v1347
    %v1349 = vpop.f32.mrb[0].mxu0
    %1350 = vmatprep.mubr.f32.mxu0 0.0
    %1351 = vmatmul.mubr.f32.gmra.mrb[0].mxu0 %v1187
    %v1352 = vpop.f32.mrb[0].mxu0
    %v1353 = vadd.f32 0.0, %v1352
    %v1354 = vpop.f32.mrb[0].mxu0
    %1355 = vmatprep.mubr.f32.mxu0 0.0
    %1356 = vmatmul.mubr.f32.gmra.mrb[0].mxu0 %v1190
    %v1357 = vpop.f32.mrb[0].mxu0
    %v1358 = vadd.f32 0.0, %v1357
    %v1359 = vpop.f32.mrb[0].mxu0
    %1360 = vdwg.mxu0
    %v1361 = vrot.slane %v1343, 4
    %v1362 = vrot.slane %v1348, 4
    %v1363 = vrot.slane %v1353, 4
    %v1364 = vrot.slane %v1358, 4
    %v1365 = vsel %vm1045, %v1363, %v1364
    %v1366 = vsel %vm1045, %v1361, %v1362
    %v1367 = vsel %vm1055, %v1366, 0.0
    %v1368 = vsel %vm1055, %v1365, 0.0
    %v1369 = vadd.f32 %v1263, %v1367
    %v1370 = vadd.f32 %v1272, %v1368
    %s1371 = scalar_lea.vmem %s9, 8
    %v1372 = vld [vmem:[%s1371] sm:$0xff]
    %1373 = vmatprep.subr.mxu0 0.0
    %1374 = vmatpush1.msra.mxu0 %v1372
    %1375 = vmatprep.subr.mxu0 0.0
    %1376 = vmatpush1.msra.mxu0 0.0
    %1377 = vmatprep.subr.mxu0 0.0
    %1378 = vmatpush1.msra.mxu0 0.0
    %1379 = vmatprep.subr.mxu0 0.0
    %1380 = vmatpush1.msra.mxu0 0.0
    %1381 = vmatprep.subr.mxu0 0.0
    %1382 = vmatpush1.msra.mxu0 0.0
    %1383 = vmatprep.subr.mxu0 0.0
    %1384 = vmatpush1.msra.mxu0 0.0
    %1385 = vmatprep.subr.mxu0 0.0
    %1386 = vmatpush1.msra.mxu0 0.0
    %1387 = vmatprep.subr.mxu0 0.0
    %1388 = vmatpush1.msra.mxu0 0.0
    %1389 = vmatprep.subr.mxu0 0.0
    %1390 = vmatpush1.msra.mxu0 0.0
    %1391 = vmatprep.subr.mxu0 0.0
    %1392 = vmatpush1.msra.mxu0 0.0
    %1393 = vmatprep.subr.mxu0 0.0
    %1394 = vmatpush1.msra.mxu0 0.0
    %1395 = vmatprep.subr.mxu0 0.0
    %1396 = vmatpush1.msra.mxu0 0.0
    %1397 = vmatprep.subr.mxu0 0.0
    %1398 = vmatpush1.msra.mxu0 0.0
    %1399 = vmatprep.subr.mxu0 0.0
    %1400 = vmatpush1.msra.mxu0 0.0
    %1401 = vmatprep.subr.mxu0 0.0
    %1402 = vmatpush1.msra.mxu0 0.0
    %1403 = vmatprep.subr.mxu0 0.0
    %1404 = vmatpush1.msra.mxu0 0.0
    %1405 = vmatprep.subr.mxu0 0.0
    %1406 = vmatpush1.msra.mxu0 0.0
    %1407 = vmatprep.subr.mxu0 0.0
    %1408 = vmatpush1.msra.mxu0 0.0
    %1409 = vmatprep.subr.mxu0 0.0
    %1410 = vmatpush1.msra.mxu0 0.0
    %1411 = vmatprep.subr.mxu0 0.0
    %1412 = vmatpush1.msra.mxu0 0.0
    %1413 = vmatprep.subr.mxu0 0.0
    %1414 = vmatpush1.msra.mxu0 0.0
    %1415 = vmatprep.subr.mxu0 0.0
    %1416 = vmatpush1.msra.mxu0 0.0
    %1417 = vmatprep.subr.mxu0 0.0
    %1418 = vmatpush1.msra.mxu0 0.0
    %1419 = vmatprep.subr.mxu0 0.0
    %1420 = vmatpush1.msra.mxu0 0.0
    %1421 = vmatprep.subr.mxu0 0.0
    %1422 = vmatpush1.msra.mxu0 0.0
    %1423 = vmatprep.subr.mxu0 0.0
    %1424 = vmatpush1.msra.mxu0 0.0
    %1425 = vmatprep.subr.mxu0 0.0
    %1426 = vmatpush1.msra.mxu0 0.0
    %1427 = vmatprep.subr.mxu0 0.0
    %1428 = vmatpush1.msra.mxu0 0.0
    %1429 = vmatprep.subr.mxu0 0.0
    %1430 = vmatpush1.msra.mxu0 0.0
    %1431 = vmatprep.subr.mxu0 0.0
    %1432 = vmatpush1.msra.mxu0 0.0
    %1433 = vmatprep.subr.mxu0 0.0
    %1434 = vmatpush1.msra.mxu0 0.0
    %1435 = vmatprep.subr.mxu0 0.0
    %1436 = vmatpush1.msra.mxu0 0.0
    %1437 = vmatprep.mubr.f32.mxu0 0.0
    %1438 = vmatmul.mubr.f32.gmra.mrb[0].mxu0 %v1181
    %v1439 = vpop.f32.mrb[0].mxu0
    %v1440 = vadd.f32 0.0, %v1439
    %v1441 = vpop.f32.mrb[0].mxu0
    %1442 = vmatprep.mubr.f32.mxu0 0.0
    %1443 = vmatmul.mubr.f32.gmra.mrb[0].mxu0 %v1184
    %v1444 = vpop.f32.mrb[0].mxu0
    %v1445 = vadd.f32 0.0, %v1444
    %v1446 = vpop.f32.mrb[0].mxu0
    %1447 = vmatprep.mubr.f32.mxu0 0.0
    %1448 = vmatmul.mubr.f32.gmra.mrb[0].mxu0 %v1187
    %v1449 = vpop.f32.mrb[0].mxu0
    %v1450 = vadd.f32 0.0, %v1449
    %v1451 = vpop.f32.mrb[0].mxu0
    %1452 = vmatprep.mubr.f32.mxu0 0.0
    %1453 = vmatmul.mubr.f32.gmra.mrb[0].mxu0 %v1190
    %v1454 = vpop.f32.mrb[0].mxu0
    %v1455 = vadd.f32 0.0, %v1454
    %v1456 = vpop.f32.mrb[0].mxu0
    %1457 = vdwg.mxu0
    %v1458 = vrot.slane %v1440, 6
    %v1459 = vrot.slane %v1445, 6
    %v1460 = vrot.slane %v1450, 6
    %v1461 = vrot.slane %v1455, 6
    %v1462 = vsel %vm389, %v1460, %v1461
    %v1463 = vsel %vm389, %v1458, %v1459
    %v1464 = vsel %vm399, %v1463, 0.0
    %v1465 = vsel %vm399, %v1462, 0.0
    %v1466 = vadd.f32 %v1369, %v1464
    %v1467 = vadd.f32 %v1370, %v1465
    %v1468 = vmax.f32 %v1466, 0.0
    %v1469 = vmax.f32 %v1467, 0.0
    %v1470 = vadd.f32 %v1468, %v846
    %v1471 = vadd.f32 %v1469, %v848
    %v1472 = vmax.f32 %v1470, 0.0
    %v1473 = vmax.f32 %v1471, 0.0
    %v1474 = vld [vmem:[%s11] sm:$0xff]
    %v1475 = vld [vmem:[%s12] sm:$0x1]
    %v1477 = vlaneseq
    %v1478 = vshrl.u32 %v1477, 7
    %v1479 = vsub.s32 0, %v1478
    %v1480 = vrot.slane %v1475, %v1479
    %v1484 = vrot.slane %v1472, 7
    %v1485 = vrot.slane %v1473, 6
    %vm1486 = vcmask 1041409
    %v1487 = vsel %vm1486, %v1485, %v1484
    %v1488 = vsel %vm534, %v1487, 0
    %1490 = vmatprep.subr.mxu0 0.0
    %1491 = vmatpush1.msra.mxu0 %v1474
    %1492 = vmatprep.subr.mxu0 0.0
    %1493 = vmatpush1.msra.mxu0 0.0
    %1494 = vmatprep.subr.mxu0 0.0
    %1495 = vmatpush1.msra.mxu0 0.0
    %1496 = vmatprep.subr.mxu0 0.0
    %1497 = vmatpush1.msra.mxu0 0.0
    %1498 = vmatprep.subr.mxu0 0.0
    %1499 = vmatpush1.msra.mxu0 0.0
    %1500 = vmatprep.subr.mxu0 0.0
    %1501 = vmatpush1.msra.mxu0 0.0
    %1502 = vmatprep.subr.mxu0 0.0
    %1503 = vmatpush1.msra.mxu0 0.0
    %1504 = vmatprep.subr.mxu0 0.0
    %1505 = vmatpush1.msra.mxu0 0.0
    %1506 = vmatprep.subr.mxu0 0.0
    %1507 = vmatpush1.msra.mxu0 0.0
    %1508 = vmatprep.subr.mxu0 0.0
    %1509 = vmatpush1.msra.mxu0 0.0
    %1510 = vmatprep.subr.mxu0 0.0
    %1511 = vmatpush1.msra.mxu0 0.0
    %1512 = vmatprep.subr.mxu0 0.0
    %1513 = vmatpush1.msra.mxu0 0.0
    %1514 = vmatprep.subr.mxu0 0.0
    %1515 = vmatpush1.msra.mxu0 0.0
    %1516 = vmatprep.subr.mxu0 0.0
    %1517 = vmatpush1.msra.mxu0 0.0
    %1518 = vmatprep.subr.mxu0 0.0
    %1519 = vmatpush1.msra.mxu0 0.0
    %1520 = vmatprep.subr.mxu0 0.0
    %1521 = vmatpush1.msra.mxu0 0.0
    %1522 = vmatprep.subr.mxu0 0.0
    %1523 = vmatpush1.msra.mxu0 0.0
    %1524 = vmatprep.subr.mxu0 0.0
    %1525 = vmatpush1.msra.mxu0 0.0
    %1526 = vmatprep.subr.mxu0 0.0
    %1527 = vmatpush1.msra.mxu0 0.0
    %1528 = vmatprep.subr.mxu0 0.0
    %1529 = vmatpush1.msra.mxu0 0.0
    %1530 = vmatprep.subr.mxu0 0.0
    %1531 = vmatpush1.msra.mxu0 0.0
    %1532 = vmatprep.subr.mxu0 0.0
    %1533 = vmatpush1.msra.mxu0 0.0
    %1534 = vmatprep.subr.mxu0 0.0
    %1535 = vmatpush1.msra.mxu0 0.0
    %1536 = vmatprep.subr.mxu0 0.0
    %1537 = vmatpush1.msra.mxu0 0.0
    %1538 = vmatprep.subr.mxu0 0.0
    %1539 = vmatpush1.msra.mxu0 0.0
    %1540 = vmatprep.subr.mxu0 0.0
    %1541 = vmatpush1.msra.mxu0 0.0
    %1542 = vmatprep.subr.mxu0 0.0
    %1543 = vmatpush1.msra.mxu0 0.0
    %1544 = vmatprep.subr.mxu0 0.0
    %1545 = vmatpush1.msra.mxu0 0.0
    %1546 = vmatprep.subr.mxu0 0.0
    %1547 = vmatpush1.msra.mxu0 0.0
    %1548 = vmatprep.subr.mxu0 0.0
    %1549 = vmatpush1.msra.mxu0 0.0
    %1550 = vmatprep.subr.mxu0 0.0
    %1551 = vmatpush1.msra.mxu0 0.0
    %1552 = vmatprep.subr.mxu0 0.0
    %1553 = vmatpush1.msra.mxu0 0.0
    %1554 = vmatprep.mubr.f32.mxu0 0.0
    %1555 = vmatmul.mubr.f32.gmra.mrb[0].mxu0 %v1488
    %v1556 = vpop.f32.mrb[0].mxu0
    %v1557 = vadd.f32 %v1480, %v1556
    %v1558 = vpop.f32.mrb[0].mxu0
    %1559 = vdwg.mxu0
    %vm1560 = vcmask 17408
    %1561 = vst.msk [vmem:[#allocation8] sm:$0x3] %vm1560, %v1557
    // Predicated region
    $region66: #{tpu_custom_call.1} parent=1 // pred_check
      _
    $region67: #{tpu_custom_call.1} parent=1 // pred_check_branch
      %1563 = sbr.rel (0) target = $region69
    $region68: #{tpu_custom_call.1} parent=1 // pred_region
      %s1565 = ssub.s32 32, 32
      %1566 = vsyncadd [#allocation4], %s1565
      %s1568 = sshll.u32 [#allocation8], 4
      %s1569 = int_to_ptr.vmem [resolvable:$true] %s1568
      %1571 = dma.vmem_to_hbm [thread:$0]  %s1569, 32, %s13, [#allocation4]
    $region69: #{tpu_custom_call.1} parent=1 // pred_fallthru
      _
    // Predicated region
    $region70: #{tpu_custom_call.1} parent=1 // pred_check
      _
    $region71: #{tpu_custom_call.1} parent=1 // pred_check_branch
      %1573 = sbr.rel (0) target = $region73
    $region72: #{tpu_custom_call.1} parent=1 // pred_region
      %1574 = dma.done [#allocation4], 32
    $region73: #{tpu_custom_call.1} parent=1 // pred_fallthru
      _
    %1575 = vsyncpa [#allocation3], 1
    %1576 = vsyncpa [#allocation6], 1
    %1577 = vsyncpa [#allocation4], 1

</llo_original>
